<compile_context>
chip_gen: v6e
topology: v6e:2x2x1
jax: 0.10.0
libtpu: 0.0.40
codegen_flags: <defaults>
</compile_context>

<pallas_src>
import functools

import jax
import jax.numpy as jnp
from jax import lax
from jax.experimental import pallas as pl
from jax.experimental.pallas import tpu as pltpu

EPS = 1e-5
LANE = 128


def _round_up(v, m):
    return ((v + m - 1) // m) * m


def _graphnet2_kernel(
    # ---- inputs ----
    x_ref,      # [Np, Cp]   f32   node features (resident, zero padded)
    a2_ref,     # [TN, Np]   int8  row panel of raw adjacency, A[target, source]
    dinv_ref,   # [Np, 1]    f32   (deg(A)+1)^-1/2, 0 on padded rows
    rdeg_ref,   # [Np, 1]    f32   raw row degree of A, 0 on padded rows
    g0_ref, b0_ref,           # bn_0 gamma/beta      [1, Cp]
    w1t_ref, b1_ref,          # GCNConv W^T / bias   [Cp, H1p], [1, H1p]
    g1_ref, be1_ref,          # bn_1 gamma/beta      [1, H1p]
    wrel_ref, wroot_ref,      # GraphConv W^T (bf16) [H1p, H2p]
    brel_ref,                 # GraphConv bias       [1, H2p]
    g2_ref, be2_ref,          # bn_2 gamma/beta      [1, H2p]
    # ---- output ----
    out_ref,    # [TN, H2p]  f32
    # ---- scratch (persists across the whole grid) ----
    xw_ref,     # [Np, H1p]  bf16  dinv * (bn0(x) @ W1^T)
    h1_ref,     # [Np, H1p]  bf16  relu(gcn_1) raw, pre-bn_1
    oacc_ref,   # [Np, H2p]  f32   relu(gcn_2) raw, pre-bn_2
    s1_ref,     # [2, H1p]   f32   bn_1 sum / sum-of-squares
    s2_ref,     # [2, H2p]   f32   bn_2 sum / sum-of-squares
    bn1_ref,    # [2, H1p]   f32   bn_1 scale / shift
    bn2_ref,    # [2, H2p]   f32   bn_2 scale / shift
    *, n_true, tile_n,
):
    f32 = jnp.float32
    bf16 = jnp.bfloat16

    phase = pl.program_id(0)
    i = pl.program_id(1)
    row0 = pl.multiple_of(i * tile_n, tile_n)
    inv_n = f32(1.0 / n_true)

    # padded rows must not pollute the BatchNorm statistics
    ridx = row0 + lax.broadcasted_iota(jnp.int32, (tile_n, 1), 0)
    rmask = (ridx < n_true).astype(f32)

    # ---------- phase 0 : bn_0 -> GCNConv -> relu ; accumulate bn_1 stats ----------
    @pl.when(phase == 0)
    def _():
        @pl.when(i == 0)
        def _():
            # bn_0 over the full resident feature matrix (padded rows are zero,
            # divide by the true node count), then fold the source-side degree
            # scaling into the features:  xws = d^-1/2 * (bn0(x) @ W1^T).
            x = x_ref[...]
            mu = jnp.sum(x, axis=0, keepdims=True) * inv_n
            var = jnp.sum(x * x, axis=0, keepdims=True) * inv_n - mu * mu
            xn = (x - mu) * (lax.rsqrt(var + EPS) * g0_ref[...]) + b0_ref[...]
            xws = dinv_ref[...] * xn                       # [Np,1] * [Np,Cp]
            xw_ref[...] = jnp.dot(
                xws, w1t_ref[...], preferred_element_type=f32
            ).astype(bf16)
            s1_ref[...] = jnp.zeros_like(s1_ref)
            s2_ref[...] = jnp.zeros_like(s2_ref)

        # Raw adjacency straight onto the MXU (int8 -> bf16 upcast only); the
        # target-side degree scale and the self-loop term are applied to the
        # small (tile_n, H1p) result instead of the (tile_n, Np) operand.
        a = a2_ref[...].astype(bf16)
        agg = jnp.dot(a, xw_ref[...], preferred_element_type=f32)
        self_term = xw_ref[pl.ds(row0, tile_n), :].astype(f32)
        dcol = dinv_ref[pl.ds(row0, tile_n), :]            # [tile_n, 1]
        h = dcol * (agg + self_term) + b1_ref[...]
        h = jnp.maximum(h, 0.0) * rmask
        h1_ref[pl.ds(row0, tile_n), :] = h.astype(bf16)
        s1_ref[0:1, :] += jnp.sum(h, axis=0, keepdims=True)
        s1_ref[1:2, :] += jnp.sum(h * h, axis=0, keepdims=True)

    # ---------- phase 1 : bn_1 (folded) ; GraphConv -> relu ; bn_2 stats -----------
    @pl.when(phase == 1)
    def _():
        @pl.when(i == 0)
        def _():
            mu = s1_ref[0:1, :] * inv_n
            var = s1_ref[1:2, :] * inv_n - mu * mu
            scale = lax.rsqrt(var + EPS) * g1_ref[...]
            bn1_ref[0:1, :] = scale
            bn1_ref[1:2, :] = be1_ref[...] - mu * scale

        scale1 = bn1_ref[0:1, :]
        shift1 = bn1_ref[1:2, :]

        # Neighbour aggregation on the RAW hidden features (bf16 MXU, f32 acc);
        # BN_1 is recovered algebraically:  A @ (h*s + b) = (A@h)*s + rowdeg*b.
        a = a2_ref[...].astype(bf16)
        agg_raw = jnp.dot(a, h1_ref[...], preferred_element_type=f32)
        rdeg = rdeg_ref[pl.ds(row0, tile_n), :]            # [tile_n, 1]
        agg = agg_raw * scale1 + rdeg * shift1
        hroot = h1_ref[pl.ds(row0, tile_n), :].astype(f32) * scale1 + shift1

        o = (jnp.dot(agg.astype(bf16), wrel_ref[...], preferred_element_type=f32)
             + jnp.dot(hroot.astype(bf16), wroot_ref[...], preferred_element_type=f32)
             + brel_ref[...])
        o = jnp.maximum(o, 0.0) * rmask
        oacc_ref[pl.ds(row0, tile_n), :] = o
        s2_ref[0:1, :] += jnp.sum(o, axis=0, keepdims=True)
        s2_ref[1:2, :] += jnp.sum(o * o, axis=0, keepdims=True)

    # ---------- phase 2 : finalize bn_2 ; write the output row tile ---------------
    @pl.when(phase == 2)
    def _():
        @pl.when(i == 0)
        def _():
            mu = s2_ref[0:1, :] * inv_n
            var = s2_ref[1:2, :] * inv_n - mu * mu
            scale = lax.rsqrt(var + EPS) * g2_ref[...]
            bn2_ref[0:1, :] = scale
            bn2_ref[1:2, :] = be2_ref[...] - mu * scale

        out_ref[...] = (oacc_ref[pl.ds(row0, tile_n), :] * bn2_ref[0:1, :]
                        + bn2_ref[1:2, :])


def _estimate_vmem(tile_n, np_, cp, h1p, h2p):
    """Rough VMEM footprint for a candidate tiling (bytes)."""
    return (
        2 * tile_n * np_ * 1                         # double-buffered int8 A panel
        + 2 * tile_n * h2p * 4                       # double-buffered output tile
        + 2 * np_ * cp * 4                           # resident x (2 buffers)
        + 2 * (cp * h1p * 4 + 2 * h1p * h2p * 2)     # W1^T (f32) + Wrel/Wroot (bf16)
        + 4 * np_ * 4                                # degree vectors
        + np_ * (2 * h1p * 2 + h2p * 4)              # xw/h1 (bf16) + oacc (f32) scratch
        + 64 * 1024                                  # small params / accumulators
    )


def graphnet2_forward(x, edge_index, params, *, tile_n=None):
    """x: [N, C_in] float32, edge_index: [2, E] int32 (row0=source, row1=target)."""
    f32 = jnp.float32
    bf16 = jnp.bfloat16
    n, c_in = x.shape
    h1 = params["w1_t"].shape[1]
    h2 = params["wroot_t"].shape[1]

    # lane-dense (128-multiple) feature widths -> unmasked stores, full MXU columns
    cp = _round_up(c_in, LANE)
    h1p = _round_up(h1, LANE)
    h2p = _round_up(h2, LANE)

    # -- tile_n / VMEM limit derived from the actual device capacity (v7x: 64 MiB) --
    vmem_cap = 64 * 1024 * 1024
    try:
        vmem_cap = int(pltpu.get_tpu_info().vmem_capacity_bytes)
    except Exception:
        pass
    if tile_n is None:
        cap_rows = max(32, _round_up(n, 32))          # int8 rows: 32-multiple
        budget = int(0.6 * vmem_cap)
        tile_n = 32
        for cand in (512, 256, 128, 64, 32):
            t = min(cand, cap_rows)
            npc = _round_up(max(n, t), t)
            if _estimate_vmem(t, npc, cp, h1p, h2p) <= budget:
                tile_n = t
                break
    np_ = _round_up(max(n, tile_n), tile_n)
    num_tiles = np_ // tile_n

    est_bytes = _estimate_vmem(tile_n, np_, cp, h1p, h2p)
    vmem_limit = None
    if est_bytes > 12 * 1024 * 1024:
        vmem_limit = min(int(est_bytes * 3 // 2), int(0.9 * vmem_cap))

    # ---- glue: dense adjacency + degree vectors ----
    # TODO(synk): edge_index scatter (dense adjacency build) has no clean Pallas
    #             TPU primitive; it stays in the JAX wrapper.
    # TODO(synk): for large sparse graphs, add a block-sparse column-panel loop
    #             with a scalar-prefetched nonzero bitmap to skip empty A panels.
    src = edge_index[0]
    tgt = edge_index[1]
    a2 = jnp.zeros((n, n), f32).at[tgt, src].add(1.0)      # A[target, source]
    rowdeg = jnp.sum(a2, axis=1)                           # raw row degree of A
    deg = rowdeg + 1.0                                     # degree of (A + I)
    dinv = lax.rsqrt(deg)

    a2_p = jnp.zeros((np_, np_), jnp.int8).at[:n, :n].set(a2.astype(jnp.int8))
    dinv_col = jnp.zeros((np_, 1), f32).at[:n, 0].set(dinv)
    rdeg_col = jnp.zeros((np_, 1), f32).at[:n, 0].set(rowdeg)
    x_p = jnp.zeros((np_, cp), f32).at[:n, :c_in].set(x)

    def pad2(w, rr, cc, dtype=f32):
        return jnp.zeros((rr, cc), dtype).at[: w.shape[0], : w.shape[1]].set(
            w.astype(dtype))

    def pad_row(v, cc, fill):
        return jnp.full((1, cc), fill, f32).at[:, : v.shape[1]].set(v)

    g0 = pad_row(params["gamma0"], cp, 1.0)
    b0 = pad_row(params["beta0"], cp, 0.0)
    w1t = pad2(params["w1_t"], cp, h1p)
    b1 = pad_row(params["b1"], h1p, 0.0)
    g1 = pad_row(params["gamma1"], h1p, 1.0)
    be1 = pad_row(params["beta1"], h1p, 0.0)
    wrel = pad2(params["wrel_t"], h1p, h2p, bf16)          # pre-cast bf16 weights
    wroot = pad2(params["wroot_t"], h1p, h2p, bf16)
    brel = pad_row(params["brel"], h2p, 0.0)
    g2 = pad_row(params["gamma2"], h2p, 1.0)
    be2 = pad_row(params["beta2"], h2p, 0.0)

    kernel = functools.partial(_graphnet2_kernel, n_true=n, tile_n=tile_n)

    rep = lambda p, i: (0, 0)        # resident / broadcast blocks (fetched once)
    tiled = lambda p, i: (i, 0)      # node-row tiles

    def a2_index(p, i):
        # phase 2 never touches the adjacency; hold the LAST-fetched panel so no
        # spurious DMA fires at the phase-1 -> phase-2 transition.
        return (jnp.where(p < 2, i, num_tiles - 1), 0)

    grid_spec = pltpu.PrefetchScalarGridSpec(
        num_scalar_prefetch=0,
        grid=(3, num_tiles),         # (phase, node-row tile)
        in_specs=[
            pl.BlockSpec((np_, cp), rep),           # x
            pl.BlockSpec((tile_n, np_), a2_index),  # raw adjacency (int8)
            pl.BlockSpec((np_, 1), rep),            # (deg+1)^-1/2
            pl.BlockSpec((np_, 1), rep),            # raw row degree
            pl.BlockSpec((1, cp), rep),             # gamma0
            pl.BlockSpec((1, cp), rep),             # beta0
            pl.BlockSpec((cp, h1p), rep),           # W1^T
            pl.BlockSpec((1, h1p), rep),            # b1
            pl.BlockSpec((1, h1p), rep),            # gamma1
            pl.BlockSpec((1, h1p), rep),            # beta1
            pl.BlockSpec((h1p, h2p), rep),          # Wrel^T (bf16)
            pl.BlockSpec((h1p, h2p), rep),          # Wroot^T (bf16)
            pl.BlockSpec((1, h2p), rep),            # brel
            pl.BlockSpec((1, h2p), rep),            # gamma2
            pl.BlockSpec((1, h2p), rep),            # beta2
        ],
        out_specs=pl.BlockSpec((tile_n, h2p), tiled),
        scratch_shapes=[
            pltpu.VMEM((np_, h1p), bf16),   # xw = dinv * (bn0(x) @ W1^T)
            pltpu.VMEM((np_, h1p), bf16),   # h1 raw (pre-bn_1)
            pltpu.VMEM((np_, h2p), f32),    # pre-bn_2 output
            pltpu.VMEM((2, h1p), f32),      # bn_1 sum / sumsq
            pltpu.VMEM((2, h2p), f32),      # bn_2 sum / sumsq
            pltpu.VMEM((2, h1p), f32),      # bn_1 scale / shift
            pltpu.VMEM((2, h2p), f32),      # bn_2 scale / shift
        ],
    )

    out_p = pl.pallas_call(
        kernel,
        grid_spec=grid_spec,
        out_shape=jax.ShapeDtypeStruct((np_, h2p), f32),
        compiler_params=pltpu.CompilerParams(
            # Both axes carry sequential state (phase ordering + BN accumulators),
            # so they stay "arbitrary".  A v7x dual-core split of the tile axis
            # would additionally need a cross-core reduction of the BN partial
            # sums (CMEM/VMEM_SHARED + core_barrier) before "parallel" is legal.
            dimension_semantics=("arbitrary", "arbitrary"),
            vmem_limit_bytes=vmem_limit,
        ),
    )(
        x_p, a2_p, dinv_col, rdeg_col,
        g0, b0, w1t, b1, g1, be1, wrel, wroot, brel, g2, be2,
    )
    return out_p[:n, :h2]


def init_params(key, c_in, h1, h2):
    k1, k2, k3, k4, k5 = jax.random.split(key, 5)
    f32 = jnp.float32

    def lin_w(k, fan_in, fan_out):
        # deterministic scaled-normal init, stored as W^T = [in, out]
        return jax.random.normal(k, (fan_in, fan_out), f32) / jnp.sqrt(f32(fan_in))

    return {
        "gamma0": jnp.ones((1, c_in), f32),
        "beta0": jnp.zeros((1, c_in), f32),
        "w1_t": lin_w(k1, c_in, h1),
        "b1": 0.01 * jax.random.normal(k2, (1, h1), f32),
        "gamma1": jnp.ones((1, h1), f32),
        "beta1": jnp.zeros((1, h1), f32),
        "wrel_t": lin_w(k3, h1, h2),
        "brel": 0.01 * jax.random.normal(k4, (1, h2), f32),
        "wroot_t": lin_w(k5, h1, h2),
        "gamma2": jnp.ones((1, h2), f32),
        "beta2": jnp.zeros((1, h2), f32),
    }


def _reference(x, edge_index, params):
    """Pure-JAX forward, mirroring the kernel's bf16 cast points (for validation)."""
    f32, bf16 = jnp.float32, jnp.bfloat16
    hp = lax.Precision.HIGHEST
    n = x.shape[0]
    src, tgt = edge_index[0], edge_index[1]
    a = jnp.zeros((n, n), f32).at[tgt, src].add(1.0)
    rowdeg = jnp.sum(a, axis=1)
    dinv = lax.rsqrt(rowdeg + 1.0)

    def bn_stats(h):
        mu = jnp.mean(h, axis=0, keepdims=True)
        var = jnp.mean(h * h, axis=0, keepdims=True) - mu * mu
        return mu, var

    # bn_0 + GCNConv (degree normalization folded into operands, as in the kernel)
    mu0, var0 = bn_stats(x)
    xn = (x - mu0) * (lax.rsqrt(var0 + EPS) * params["gamma0"]) + params["beta0"]
    xws = (dinv[:, None] * jnp.dot(xn, params["w1_t"], precision=hp)
           ).astype(bf16).astype(f32)
    h = dinv[:, None] * (jnp.dot(a, xws, precision=hp) + xws) + params["b1"]
    h_raw = jnp.maximum(h, 0.0)

    # bn_1 folded through the aggregation + GraphConv
    mu1, var1 = bn_stats(h_raw)
    scale1 = lax.rsqrt(var1 + EPS) * params["gamma1"]
    shift1 = params["beta1"] - mu1 * scale1
    h_bf = h_raw.astype(bf16).astype(f32)
    agg = jnp.dot(a, h_bf, precision=hp) * scale1 + rowdeg[:, None] * shift1
    hroot = h_bf * scale1 + shift1
    wrel = params["wrel_t"].astype(bf16).astype(f32)
    wroot = params["wroot_t"].astype(bf16).astype(f32)
    o = (jnp.dot(agg.astype(bf16).astype(f32), wrel, precision=hp)
         + jnp.dot(hroot.astype(bf16).astype(f32), wroot, precision=hp)
         + params["brel"])
    o = jnp.maximum(o, 0.0)

    mu2, var2 = bn_stats(o)
    scale2 = lax.rsqrt(var2 + EPS) * params["gamma2"]
    return o * scale2 + (params["beta2"] - mu2 * scale2)


if __name__ == "__main__":
    key = jax.random.PRNGKey(0)
    kx, kp = jax.random.split(key)

    N, C_IN, H1, H2 = 32, 8, 16, 32

    # node features
    x = jax.random.normal(kx, (N, C_IN), jnp.float32)

    # deterministic bidirectional ring graph: E = 2*N edges
    i = jnp.arange(N, dtype=jnp.int32)
    j = (i + 1) % N
    edge_index = jnp.stack(
        [jnp.concatenate([i, j]), jnp.concatenate([j, i])], axis=0
    )  # [2, 64]

    params = init_params(kp, C_IN, H1, H2)

    out = graphnet2_forward(x, edge_index, params)
    out = jax.block_until_ready(out)

    assert out.shape == (N, H2) and out.dtype == jnp.float32
    assert bool(jnp.all(jnp.isfinite(out)))

    ref = _reference(x, edge_index, params)
    max_err = float(jnp.max(jnp.abs(out - ref)))
    assert max_err < 5e-2, f"max abs error vs reference: {max_err}"

    print("KERNEL_OK")
</pallas_src>

<mosaic_0001>
module attributes {stable_mosaic.version = 11 : i64} {
  func.func @_graphnet2_kernel(%arg0: i32, %arg1: i32, %arg2: memref<32x128xf32, #tpu.memory_space<vmem>>, %arg3: memref<32x32xi8, #tpu.memory_space<vmem>>, %arg4: memref<32x1xf32, #tpu.memory_space<vmem>>, %arg5: memref<32x1xf32, #tpu.memory_space<vmem>>, %arg6: memref<1x128xf32, #tpu.memory_space<vmem>>, %arg7: memref<1x128xf32, #tpu.memory_space<vmem>>, %arg8: memref<128x128xf32, #tpu.memory_space<vmem>>, %arg9: memref<1x128xf32, #tpu.memory_space<vmem>>, %arg10: memref<1x128xf32, #tpu.memory_space<vmem>>, %arg11: memref<1x128xf32, #tpu.memory_space<vmem>>, %arg12: memref<128x128xbf16, #tpu.memory_space<vmem>>, %arg13: memref<128x128xbf16, #tpu.memory_space<vmem>>, %arg14: memref<1x128xf32, #tpu.memory_space<vmem>>, %arg15: memref<1x128xf32, #tpu.memory_space<vmem>>, %arg16: memref<1x128xf32, #tpu.memory_space<vmem>>, %arg17: memref<32x128xf32, #tpu.memory_space<vmem>>, %arg18: memref<32x128xbf16, #tpu.memory_space<vmem>>, %arg19: memref<32x128xbf16, #tpu.memory_space<vmem>>, %arg20: memref<32x128xf32, #tpu.memory_space<vmem>>, %arg21: memref<2x128xf32, #tpu.memory_space<vmem>>, %arg22: memref<2x128xf32, #tpu.memory_space<vmem>>, %arg23: memref<2x128xf32, #tpu.memory_space<vmem>>, %arg24: memref<2x128xf32, #tpu.memory_space<vmem>>) attributes {dimension_semantics = [#tpu.dimension_semantics<arbitrary>, #tpu.dimension_semantics<arbitrary>], iteration_bounds = array<i64: 3, 1>, scalar_prefetch = 0 : i64, scratch_operands = 7 : i64, tpu.core_type = #tpu.core_type<tc>, window_params = [{pipeline_mode = #tpu.pipeline_mode<synchronous>, transform_indices = @transform_0, window_bounds = array<i64: 32, 128>}, {transform_indices = @transform_1, window_bounds = array<i64: 32, 32>}, {pipeline_mode = #tpu.pipeline_mode<synchronous>, transform_indices = @transform_2, window_bounds = array<i64: 32, 1>}, {pipeline_mode = #tpu.pipeline_mode<synchronous>, transform_indices = @transform_3, window_bounds = array<i64: 32, 1>}, {pipeline_mode = #tpu.pipeline_mode<synchronous>, transform_indices = @transform_4, window_bounds = array<i64: 1, 128>}, {pipeline_mode = #tpu.pipeline_mode<synchronous>, transform_indices = @transform_5, window_bounds = array<i64: 1, 128>}, {pipeline_mode = #tpu.pipeline_mode<synchronous>, transform_indices = @transform_6, window_bounds = array<i64: 128, 128>}, {pipeline_mode = #tpu.pipeline_mode<synchronous>, transform_indices = @transform_7, window_bounds = array<i64: 1, 128>}, {pipeline_mode = #tpu.pipeline_mode<synchronous>, transform_indices = @transform_8, window_bounds = array<i64: 1, 128>}, {pipeline_mode = #tpu.pipeline_mode<synchronous>, transform_indices = @transform_9, window_bounds = array<i64: 1, 128>}, {pipeline_mode = #tpu.pipeline_mode<synchronous>, transform_indices = @transform_10, window_bounds = array<i64: 128, 128>}, {pipeline_mode = #tpu.pipeline_mode<synchronous>, transform_indices = @transform_11, window_bounds = array<i64: 128, 128>}, {pipeline_mode = #tpu.pipeline_mode<synchronous>, transform_indices = @transform_12, window_bounds = array<i64: 1, 128>}, {pipeline_mode = #tpu.pipeline_mode<synchronous>, transform_indices = @transform_13, window_bounds = array<i64: 1, 128>}, {pipeline_mode = #tpu.pipeline_mode<synchronous>, transform_indices = @transform_14, window_bounds = array<i64: 1, 128>}, {transform_indices = @transform_15, window_bounds = array<i64: 32, 128>}]} {
    %c32_i32 = arith.constant 32 : i32
    %0 = arith.muli %arg1, %c32_i32 : i32
    %1 = tpu.assume_multiple %0, 32 : i32
    %2 = tpu.iota {dimensions = array<i32: 0>} : vector<32x1xi32>
    %3 = vector.broadcast %1 : i32 to vector<32x1xi32>
    %4 = arith.addi %3, %2 : vector<32x1xi32>
    %c32_i32_0 = arith.constant 32 : i32
    %5 = vector.broadcast %c32_i32_0 : i32 to vector<32x1xi32>
    %6 = arith.cmpi slt, %4, %5 : vector<32x1xi32>
    %7 = arith.extui %6 : vector<32x1xi1> to vector<32x1xi32>
    %8 = arith.sitofp %7 : vector<32x1xi32> to vector<32x1xf32>
    %c0_i32 = arith.constant 0 : i32
    %9 = arith.cmpi eq, %arg0, %c0_i32 : i32
    %10 = arith.extui %9 : i1 to i32
    %cst = arith.constant 3.125000e-02 : f32
    %c0_i32_1 = arith.constant 0 : i32
    %11 = arith.cmpi ne, %10, %c0_i32_1 : i32
    scf.if %11 {
      %c0_i32_6 = arith.constant 0 : i32
      %18 = arith.cmpi eq, %arg1, %c0_i32_6 : i32
      %19 = arith.extui %18 : i1 to i32
      %c0_i32_7 = arith.constant 0 : i32
      %20 = arith.cmpi ne, %19, %c0_i32_7 : i32
      scf.if %20 {
        %c0_27 = arith.constant 0 : index
        %c0_28 = arith.constant 0 : index
        %54 = vector.load %arg2[%c0_27, %c0_28] : memref<32x128xf32, #tpu.memory_space<vmem>>, vector<32x128xf32>
        %cst_29 = arith.constant dense<0.000000e+00> : vector<128xf32>
        %55 = vector.multi_reduction <add>, %54, %cst_29 [0] : vector<32x128xf32> to vector<128xf32>
        %56 = vector.shape_cast %55 : vector<128xf32> to vector<1x128xf32>
        %57 = vector.broadcast %cst : f32 to vector<1x128xf32>
        %58 = arith.mulf %56, %57 : vector<1x128xf32>
        %59 = arith.mulf %54, %54 : vector<32x128xf32>
        %cst_30 = arith.constant dense<0.000000e+00> : vector<128xf32>
        %60 = vector.multi_reduction <add>, %59, %cst_30 [0] : vector<32x128xf32> to vector<128xf32>
        %61 = vector.shape_cast %60 : vector<128xf32> to vector<1x128xf32>
        %62 = vector.broadcast %cst : f32 to vector<1x128xf32>
        %63 = arith.mulf %61, %62 : vector<1x128xf32>
        %64 = arith.mulf %58, %58 : vector<1x128xf32>
        %65 = arith.subf %63, %64 : vector<1x128xf32>
        %66 = vector.broadcast %58 : vector<1x128xf32> to vector<32x128xf32>
        %67 = arith.subf %54, %66 : vector<32x128xf32>
        %cst_31 = arith.constant 9.99999974E-6 : f32
        %68 = vector.broadcast %cst_31 : f32 to vector<1x128xf32>
        %69 = arith.addf %65, %68 : vector<1x128xf32>
        %70 = math.rsqrt %69 : vector<1x128xf32>
        %c0_32 = arith.constant 0 : index
        %c0_33 = arith.constant 0 : index
        %71 = vector.load %arg6[%c0_32, %c0_33] : memref<1x128xf32, #tpu.memory_space<vmem>>, vector<1x128xf32>
        %72 = arith.mulf %70, %71 : vector<1x128xf32>
        %73 = vector.broadcast %72 : vector<1x128xf32> to vector<32x128xf32>
        %74 = arith.mulf %67, %73 : vector<32x128xf32>
        %c0_34 = arith.constant 0 : index
        %c0_35 = arith.constant 0 : index
        %75 = vector.load %arg7[%c0_34, %c0_35] : memref<1x128xf32, #tpu.memory_space<vmem>>, vector<1x128xf32>
        %76 = vector.broadcast %75 : vector<1x128xf32> to vector<32x128xf32>
        %77 = arith.addf %74, %76 : vector<32x128xf32>
        %c0_36 = arith.constant 0 : index
        %c0_37 = arith.constant 0 : index
        %78 = vector.load %arg4[%c0_36, %c0_37] : memref<32x1xf32, #tpu.memory_space<vmem>>, vector<32x1xf32>
        %79 = vector.broadcast %78 : vector<32x1xf32> to vector<32x128xf32>
        %80 = arith.mulf %79, %77 : vector<32x128xf32>
        %c0_38 = arith.constant 0 : index
        %c0_39 = arith.constant 0 : index
        %81 = vector.load %arg8[%c0_38, %c0_39] : memref<128x128xf32, #tpu.memory_space<vmem>>, vector<128x128xf32>
        %cst_40 = arith.constant dense<0.000000e+00> : vector<32x128xf32>
        %82 = tpu.matmul %80, %81, %cst_40 {dimension_numbers = #tpu.dot_dimension_numbers<[1], [0], [0], [1], [0, 0, 1, 1], [], []>} : vector<32x128xf32>, vector<128x128xf32>, vector<32x128xf32> -> vector<32x128xf32>
        %83 = arith.truncf %82 : vector<32x128xf32> to vector<32x128xbf16>
        %c0_41 = arith.constant 0 : index
        %c0_42 = arith.constant 0 : index
        %84 = vector.load %arg18[%c0_41, %c0_42] : memref<32x128xbf16, #tpu.memory_space<vmem>>, vector<32x128xbf16>
        tpu.vector_store %arg18[%c0_41, %c0_42], %83 {strides = array<i32>} : memref<32x128xbf16, #tpu.memory_space<vmem>>, vector<32x128xbf16>,
        %cst_43 = arith.constant 0.000000e+00 : f32
        %85 = vector.broadcast %cst_43 : f32 to vector<2x128xf32>
        %c0_44 = arith.constant 0 : index
        %c0_45 = arith.constant 0 : index
        %86 = vector.load %arg21[%c0_44, %c0_45] : memref<2x128xf32, #tpu.memory_space<vmem>>, vector<2x128xf32>
        tpu.vector_store %arg21[%c0_44, %c0_45], %85 {strides = array<i32>} : memref<2x128xf32, #tpu.memory_space<vmem>>, vector<2x128xf32>,
        %cst_46 = arith.constant 0.000000e+00 : f32
        %87 = vector.broadcast %cst_46 : f32 to vector<2x128xf32>
        %c0_47 = arith.constant 0 : index
        %c0_48 = arith.constant 0 : index
        %88 = vector.load %arg22[%c0_47, %c0_48] : memref<2x128xf32, #tpu.memory_space<vmem>>, vector<2x128xf32>
        tpu.vector_store %arg22[%c0_47, %c0_48], %87 {strides = array<i32>} : memref<2x128xf32, #tpu.memory_space<vmem>>, vector<2x128xf32>,
      } else {
      }
      %c0 = arith.constant 0 : index
      %c0_8 = arith.constant 0 : index
      %21 = vector.load %arg3[%c0, %c0_8] : memref<32x32xi8, #tpu.memory_space<vmem>>, vector<32x32xi8>
      %22 = arith.sitofp %21 : vector<32x32xi8> to vector<32x32xbf16>
      %c0_9 = arith.constant 0 : index
      %c0_10 = arith.constant 0 : index
      %23 = vector.load %arg18[%c0_9, %c0_10] : memref<32x128xbf16, #tpu.memory_space<vmem>>, vector<32x128xbf16>
      %cst_11 = arith.constant dense<0.000000e+00> : vector<32x128xf32>
      %24 = tpu.matmul %22, %23, %cst_11 {dimension_numbers = #tpu.dot_dimension_numbers<[1], [0], [0], [1], [0, 0, 1, 1], [], []>} : vector<32x32xbf16>, vector<32x128xbf16>, vector<32x128xf32> -> vector<32x128xf32>
      %25 = arith.index_cast %1 : i32 to index
      %c0_12 = arith.constant 0 : index
      %26 = vector.load %arg18[%25, %c0_12] : memref<32x128xbf16, #tpu.memory_space<vmem>>, vector<32x128xbf16>
      %27 = arith.extf %26 : vector<32x128xbf16> to vector<32x128xf32>
      %28 = arith.index_cast %1 : i32 to index
      %c0_13 = arith.constant 0 : index
      %29 = vector.load %arg4[%28, %c0_13] : memref<32x1xf32, #tpu.memory_space<vmem>>, vector<32x1xf32>
      %30 = arith.addf %24, %27 : vector<32x128xf32>
      %31 = vector.broadcast %29 : vector<32x1xf32> to vector<32x128xf32>
      %32 = arith.mulf %31, %30 : vector<32x128xf32>
      %c0_14 = arith.constant 0 : index
      %c0_15 = arith.constant 0 : index
      %33 = vector.load %arg9[%c0_14, %c0_15] : memref<1x128xf32, #tpu.memory_space<vmem>>, vector<1x128xf32>
      %34 = vector.broadcast %33 : vector<1x128xf32> to vector<32x128xf32>
      %35 = arith.addf %32, %34 : vector<32x128xf32>
      %cst_16 = arith.constant 0.000000e+00 : f32
      %36 = vector.broadcast %cst_16 : f32 to vector<32x128xf32>
      %37 = arith.maximumf %35, %36 : vector<32x128xf32>
      %38 = vector.broadcast %8 : vector<32x1xf32> to vector<32x128xf32>
      %39 = arith.mulf %37, %38 : vector<32x128xf32>
      %40 = arith.truncf %39 : vector<32x128xf32> to vector<32x128xbf16>
      %41 = arith.index_cast %1 : i32 to index
      %c0_17 = arith.constant 0 : index
      %42 = vector.load %arg19[%41, %c0_17] : memref<32x128xbf16, #tpu.memory_space<vmem>>, vector<32x128xbf16>
      tpu.vector_store %arg19[%41, %c0_17], %40 {strides = array<i32>} : memref<32x128xbf16, #tpu.memory_space<vmem>>, vector<32x128xbf16>,
      %c0_18 = arith.constant 0 : index
      %c0_19 = arith.constant 0 : index
      %43 = vector.load %arg21[%c0_18, %c0_19] : memref<2x128xf32, #tpu.memory_space<vmem>>, vector<1x128xf32>
      %cst_20 = arith.constant dense<0.000000e+00> : vector<128xf32>
      %44 = vector.multi_reduction <add>, %39, %cst_20 [0] : vector<32x128xf32> to vector<128xf32>
      %45 = vector.shape_cast %44 : vector<128xf32> to vector<1x128xf32>
      %46 = arith.addf %43, %45 : vector<1x128xf32>
      %c0_21 = arith.constant 0 : index
      %c0_22 = arith.constant 0 : index
      %47 = vector.load %arg21[%c0_21, %c0_22] : memref<2x128xf32, #tpu.memory_space<vmem>>, vector<1x128xf32>
      tpu.vector_store %arg21[%c0_21, %c0_22], %46 {strides = array<i32>} : memref<2x128xf32, #tpu.memory_space<vmem>>, vector<1x128xf32>,
      %c1 = arith.constant 1 : index
      %c0_23 = arith.constant 0 : index
      %48 = vector.load %arg21[%c1, %c0_23] : memref<2x128xf32, #tpu.memory_space<vmem>>, vector<1x128xf32>
      %49 = arith.mulf %39, %39 : vector<32x128xf32>
      %cst_24 = arith.constant dense<0.000000e+00> : vector<128xf32>
      %50 = vector.multi_reduction <add>, %49, %cst_24 [0] : vector<32x128xf32> to vector<128xf32>
      %51 = vector.shape_cast %50 : vector<128xf32> to vector<1x128xf32>
      %52 = arith.addf %48, %51 : vector<1x128xf32>
      %c1_25 = arith.constant 1 : index
      %c0_26 = arith.constant 0 : index
      %53 = vector.load %arg21[%c1_25, %c0_26] : memref<2x128xf32, #tpu.memory_space<vmem>>, vector<1x128xf32>
      tpu.vector_store %arg21[%c1_25, %c0_26], %52 {strides = array<i32>} : memref<2x128xf32, #tpu.memory_space<vmem>>, vector<1x128xf32>,
    } else {
    }
    %c1_i32 = arith.constant 1 : i32
    %12 = arith.cmpi eq, %arg0, %c1_i32 : i32
    %13 = arith.extui %12 : i1 to i32
    %cst_2 = arith.constant 3.125000e-02 : f32
    %c0_i32_3 = arith.constant 0 : i32
    %14 = arith.cmpi ne, %13, %c0_i32_3 : i32
    scf.if %14 {
      %c0_i32_6 = arith.constant 0 : i32
      %18 = arith.cmpi eq, %arg1, %c0_i32_6 : i32
      %19 = arith.extui %18 : i1 to i32
      %c0_i32_7 = arith.constant 0 : i32
      %20 = arith.cmpi ne, %19, %c0_i32_7 : i32
      scf.if %20 {
        %c0_37 = arith.constant 0 : index
        %c0_38 = arith.constant 0 : index
        %69 = vector.load %arg21[%c0_37, %c0_38] : memref<2x128xf32, #tpu.memory_space<vmem>>, vector<1x128xf32>
        %70 = vector.broadcast %cst_2 : f32 to vector<1x128xf32>
        %71 = arith.mulf %69, %70 : vector<1x128xf32>
        %c1_39 = arith.constant 1 : index
        %c0_40 = arith.constant 0 : index
        %72 = vector.load %arg21[%c1_39, %c0_40] : memref<2x128xf32, #tpu.memory_space<vmem>>, vector<1x128xf32>
        %73 = vector.broadcast %cst_2 : f32 to vector<1x128xf32>
        %74 = arith.mulf %72, %73 : vector<1x128xf32>
        %75 = arith.mulf %71, %71 : vector<1x128xf32>
        %76 = arith.subf %74, %75 : vector<1x128xf32>
        %cst_41 = arith.constant 9.99999974E-6 : f32
        %77 = vector.broadcast %cst_41 : f32 to vector<1x128xf32>
        %78 = arith.addf %76, %77 : vector<1x128xf32>
        %79 = math.rsqrt %78 : vector<1x128xf32>
        %c0_42 = arith.constant 0 : index
        %c0_43 = arith.constant 0 : index
        %80 = vector.load %arg10[%c0_42, %c0_43] : memref<1x128xf32, #tpu.memory_space<vmem>>, vector<1x128xf32>
        %81 = arith.mulf %79, %80 : vector<1x128xf32>
        %c0_44 = arith.constant 0 : index
        %c0_45 = arith.constant 0 : index
        %82 = vector.load %arg23[%c0_44, %c0_45] : memref<2x128xf32, #tpu.memory_space<vmem>>, vector<1x128xf32>
        tpu.vector_store %arg23[%c0_44, %c0_45], %81 {strides = array<i32>} : memref<2x128xf32, #tpu.memory_space<vmem>>, vector<1x128xf32>,
        %c0_46 = arith.constant 0 : index
        %c0_47 = arith.constant 0 : index
        %83 = vector.load %arg11[%c0_46, %c0_47] : memref<1x128xf32, #tpu.memory_space<vmem>>, vector<1x128xf32>
        %84 = arith.mulf %71, %81 : vector<1x128xf32>
        %85 = arith.subf %83, %84 : vector<1x128xf32>
        %c1_48 = arith.constant 1 : index
        %c0_49 = arith.constant 0 : index
        %86 = vector.load %arg23[%c1_48, %c0_49] : memref<2x128xf32, #tpu.memory_space<vmem>>, vector<1x128xf32>
        tpu.vector_store %arg23[%c1_48, %c0_49], %85 {strides = array<i32>} : memref<2x128xf32, #tpu.memory_space<vmem>>, vector<1x128xf32>,
      } else {
      }
      %c0 = arith.constant 0 : index
      %c0_8 = arith.constant 0 : index
      %21 = vector.load %arg23[%c0, %c0_8] : memref<2x128xf32, #tpu.memory_space<vmem>>, vector<1x128xf32>
      %c1 = arith.constant 1 : index
      %c0_9 = arith.constant 0 : index
      %22 = vector.load %arg23[%c1, %c0_9] : memref<2x128xf32, #tpu.memory_space<vmem>>, vector<1x128xf32>
      %c0_10 = arith.constant 0 : index
      %c0_11 = arith.constant 0 : index
      %23 = vector.load %arg3[%c0_10, %c0_11] : memref<32x32xi8, #tpu.memory_space<vmem>>, vector<32x32xi8>
      %24 = arith.sitofp %23 : vector<32x32xi8> to vector<32x32xbf16>
      %c0_12 = arith.constant 0 : index
      %c0_13 = arith.constant 0 : index
      %25 = vector.load %arg19[%c0_12, %c0_13] : memref<32x128xbf16, #tpu.memory_space<vmem>>, vector<32x128xbf16>
      %cst_14 = arith.constant dense<0.000000e+00> : vector<32x128xf32>
      %26 = tpu.matmul %24, %25, %cst_14 {dimension_numbers = #tpu.dot_dimension_numbers<[1], [0], [0], [1], [0, 0, 1, 1], [], []>} : vector<32x32xbf16>, vector<32x128xbf16>, vector<32x128xf32> -> vector<32x128xf32>
      %27 = arith.index_cast %1 : i32 to index
      %c0_15 = arith.constant 0 : index
      %28 = vector.load %arg5[%27, %c0_15] : memref<32x1xf32, #tpu.memory_space<vmem>>, vector<32x1xf32>
      %29 = vector.broadcast %21 : vector<1x128xf32> to vector<32x128xf32>
      %30 = arith.mulf %26, %29 : vector<32x128xf32>
      %31 = vector.broadcast %28 : vector<32x1xf32> to vector<32x128xf32>
      %32 = vector.broadcast %22 : vector<1x128xf32> to vector<32x128xf32>
      %33 = arith.mulf %31, %32 : vector<32x128xf32>
      %34 = arith.addf %30, %33 : vector<32x128xf32>
      %35 = arith.index_cast %1 : i32 to index
      %c0_16 = arith.constant 0 : index
      %36 = vector.load %arg19[%35, %c0_16] : memref<32x128xbf16, #tpu.memory_space<vmem>>, vector<32x128xbf16>
      %37 = arith.extf %36 : vector<32x128xbf16> to vector<32x128xf32>
      %38 = vector.broadcast %21 : vector<1x128xf32> to vector<32x128xf32>
      %39 = arith.mulf %37, %38 : vector<32x128xf32>
      %40 = vector.broadcast %22 : vector<1x128xf32> to vector<32x128xf32>
      %41 = arith.addf %39, %40 : vector<32x128xf32>
      %42 = arith.truncf %34 : vector<32x128xf32> to vector<32x128xbf16>
      %c0_17 = arith.constant 0 : index
      %c0_18 = arith.constant 0 : index
      %43 = vector.load %arg12[%c0_17, %c0_18] : memref<128x128xbf16, #tpu.memory_space<vmem>>, vector<128x128xbf16>
      %cst_19 = arith.constant dense<0.000000e+00> : vector<32x128xf32>
      %44 = tpu.matmul %42, %43, %cst_19 {dimension_numbers = #tpu.dot_dimension_numbers<[1], [0], [0], [1], [0, 0, 1, 1], [], []>} : vector<32x128xbf16>, vector<128x128xbf16>, vector<32x128xf32> -> vector<32x128xf32>
      %45 = arith.truncf %41 : vector<32x128xf32> to vector<32x128xbf16>
      %c0_20 = arith.constant 0 : index
      %c0_21 = arith.constant 0 : index
      %46 = vector.load %arg13[%c0_20, %c0_21] : memref<128x128xbf16, #tpu.memory_space<vmem>>, vector<128x128xbf16>
      %cst_22 = arith.constant dense<0.000000e+00> : vector<32x128xf32>
      %47 = tpu.matmul %45, %46, %cst_22 {dimension_numbers = #tpu.dot_dimension_numbers<[1], [0], [0], [1], [0, 0, 1, 1], [], []>} : vector<32x128xbf16>, vector<128x128xbf16>, vector<32x128xf32> -> vector<32x128xf32>
      %48 = arith.addf %44, %47 : vector<32x128xf32>
      %c0_23 = arith.constant 0 : index
      %c0_24 = arith.constant 0 : index
      %49 = vector.load %arg14[%c0_23, %c0_24] : memref<1x128xf32, #tpu.memory_space<vmem>>, vector<1x128xf32>
      %50 = vector.broadcast %49 : vector<1x128xf32> to vector<32x128xf32>
      %51 = arith.addf %48, %50 : vector<32x128xf32>
      %cst_25 = arith.constant 0.000000e+00 : f32
      %52 = vector.broadcast %cst_25 : f32 to vector<32x128xf32>
      %53 = arith.maximumf %51, %52 : vector<32x128xf32>
      %54 = vector.broadcast %8 : vector<32x1xf32> to vector<32x128xf32>
      %55 = arith.mulf %53, %54 : vector<32x128xf32>
      %56 = arith.index_cast %1 : i32 to index
      %c0_26 = arith.constant 0 : index
      %57 = vector.load %arg20[%56, %c0_26] : memref<32x128xf32, #tpu.memory_space<vmem>>, vector<32x128xf32>
      tpu.vector_store %arg20[%56, %c0_26], %55 {strides = array<i32>} : memref<32x128xf32, #tpu.memory_space<vmem>>, vector<32x128xf32>,
      %c0_27 = arith.constant 0 : index
      %c0_28 = arith.constant 0 : index
      %58 = vector.load %arg22[%c0_27, %c0_28] : memref<2x128xf32, #tpu.memory_space<vmem>>, vector<1x128xf32>
      %cst_29 = arith.constant dense<0.000000e+00> : vector<128xf32>
      %59 = vector.multi_reduction <add>, %55, %cst_29 [0] : vector<32x128xf32> to vector<128xf32>
      %60 = vector.shape_cast %59 : vector<128xf32> to vector<1x128xf32>
      %61 = arith.addf %58, %60 : vector<1x128xf32>
      %c0_30 = arith.constant 0 : index
      %c0_31 = arith.constant 0 : index
      %62 = vector.load %arg22[%c0_30, %c0_31] : memref<2x128xf32, #tpu.memory_space<vmem>>, vector<1x128xf32>
      tpu.vector_store %arg22[%c0_30, %c0_31], %61 {strides = array<i32>} : memref<2x128xf32, #tpu.memory_space<vmem>>, vector<1x128xf32>,
      %c1_32 = arith.constant 1 : index
      %c0_33 = arith.constant 0 : index
      %63 = vector.load %arg22[%c1_32, %c0_33] : memref<2x128xf32, #tpu.memory_space<vmem>>, vector<1x128xf32>
      %64 = arith.mulf %55, %55 : vector<32x128xf32>
      %cst_34 = arith.constant dense<0.000000e+00> : vector<128xf32>
      %65 = vector.multi_reduction <add>, %64, %cst_34 [0] : vector<32x128xf32> to vector<128xf32>
      %66 = vector.shape_cast %65 : vector<128xf32> to vector<1x128xf32>
      %67 = arith.addf %63, %66 : vector<1x128xf32>
      %c1_35 = arith.constant 1 : index
      %c0_36 = arith.constant 0 : index
      %68 = vector.load %arg22[%c1_35, %c0_36] : memref<2x128xf32, #tpu.memory_space<vmem>>, vector<1x128xf32>
      tpu.vector_store %arg22[%c1_35, %c0_36], %67 {strides = array<i32>} : memref<2x128xf32, #tpu.memory_space<vmem>>, vector<1x128xf32>,
    } else {
    }
    %c2_i32 = arith.constant 2 : i32
    %15 = arith.cmpi eq, %arg0, %c2_i32 : i32
    %16 = arith.extui %15 : i1 to i32
    %cst_4 = arith.constant 3.125000e-02 : f32
    %c0_i32_5 = arith.constant 0 : i32
    %17 = arith.cmpi ne, %16, %c0_i32_5 : i32
    scf.if %17 {
      %c0_i32_6 = arith.constant 0 : i32
      %18 = arith.cmpi eq, %arg1, %c0_i32_6 : i32
      %19 = arith.extui %18 : i1 to i32
      %c0_i32_7 = arith.constant 0 : i32
      %20 = arith.cmpi ne, %19, %c0_i32_7 : i32
      scf.if %20 {
        %c0_13 = arith.constant 0 : index
        %c0_14 = arith.constant 0 : index
        %30 = vector.load %arg22[%c0_13, %c0_14] : memref<2x128xf32, #tpu.memory_space<vmem>>, vector<1x128xf32>
        %31 = vector.broadcast %cst_4 : f32 to vector<1x128xf32>
        %32 = arith.mulf %30, %31 : vector<1x128xf32>
        %c1_15 = arith.constant 1 : index
        %c0_16 = arith.constant 0 : index
        %33 = vector.load %arg22[%c1_15, %c0_16] : memref<2x128xf32, #tpu.memory_space<vmem>>, vector<1x128xf32>
        %34 = vector.broadcast %cst_4 : f32 to vector<1x128xf32>
        %35 = arith.mulf %33, %34 : vector<1x128xf32>
        %36 = arith.mulf %32, %32 : vector<1x128xf32>
        %37 = arith.subf %35, %36 : vector<1x128xf32>
        %cst_17 = arith.constant 9.99999974E-6 : f32
        %38 = vector.broadcast %cst_17 : f32 to vector<1x128xf32>
        %39 = arith.addf %37, %38 : vector<1x128xf32>
        %40 = math.rsqrt %39 : vector<1x128xf32>
        %c0_18 = arith.constant 0 : index
        %c0_19 = arith.constant 0 : index
        %41 = vector.load %arg15[%c0_18, %c0_19] : memref<1x128xf32, #tpu.memory_space<vmem>>, vector<1x128xf32>
        %42 = arith.mulf %40, %41 : vector<1x128xf32>
        %c0_20 = arith.constant 0 : index
        %c0_21 = arith.constant 0 : index
        %43 = vector.load %arg24[%c0_20, %c0_21] : memref<2x128xf32, #tpu.memory_space<vmem>>, vector<1x128xf32>
        tpu.vector_store %arg24[%c0_20, %c0_21], %42 {strides = array<i32>} : memref<2x128xf32, #tpu.memory_space<vmem>>, vector<1x128xf32>,
        %c0_22 = arith.constant 0 : index
        %c0_23 = arith.constant 0 : index
        %44 = vector.load %arg16[%c0_22, %c0_23] : memref<1x128xf32, #tpu.memory_space<vmem>>, vector<1x128xf32>
        %45 = arith.mulf %32, %42 : vector<1x128xf32>
        %46 = arith.subf %44, %45 : vector<1x128xf32>
        %c1_24 = arith.constant 1 : index
        %c0_25 = arith.constant 0 : index
        %47 = vector.load %arg24[%c1_24, %c0_25] : memref<2x128xf32, #tpu.memory_space<vmem>>, vector<1x128xf32>
        tpu.vector_store %arg24[%c1_24, %c0_25], %46 {strides = array<i32>} : memref<2x128xf32, #tpu.memory_space<vmem>>, vector<1x128xf32>,
      } else {
      }
      %21 = arith.index_cast %1 : i32 to index
      %c0 = arith.constant 0 : index
      %22 = vector.load %arg20[%21, %c0] : memref<32x128xf32, #tpu.memory_space<vmem>>, vector<32x128xf32>
      %c0_8 = arith.constant 0 : index
      %c0_9 = arith.constant 0 : index
      %23 = vector.load %arg24[%c0_8, %c0_9] : memref<2x128xf32, #tpu.memory_space<vmem>>, vector<1x128xf32>
      %24 = vector.broadcast %23 : vector<1x128xf32> to vector<32x128xf32>
      %25 = arith.mulf %22, %24 : vector<32x128xf32>
      %c1 = arith.constant 1 : index
      %c0_10 = arith.constant 0 : index
      %26 = vector.load %arg24[%c1, %c0_10] : memref<2x128xf32, #tpu.memory_space<vmem>>, vector<1x128xf32>
      %27 = vector.broadcast %26 : vector<1x128xf32> to vector<32x128xf32>
      %28 = arith.addf %25, %27 : vector<32x128xf32>
      %c0_11 = arith.constant 0 : index
      %c0_12 = arith.constant 0 : index
      %29 = vector.load %arg17[%c0_11, %c0_12] : memref<32x128xf32, #tpu.memory_space<vmem>>, vector<32x128xf32>
      tpu.vector_store %arg17[%c0_11, %c0_12], %28 {strides = array<i32>} : memref<32x128xf32, #tpu.memory_space<vmem>>, vector<32x128xf32>,
    } else {
    }
    return
  }
  func.func @transform_0(%arg0: i32, %arg1: i32) -> (i32, i32) {
    %c0_i32 = arith.constant 0 : i32
    %c0_i32_0 = arith.constant 0 : i32
    %c0_i32_1 = arith.constant 0 : i32
    return %c0_i32, %c0_i32_0 : i32, i32
  }
  func.func @transform_1(%arg0: i32, %arg1: i32) -> (i32, i32) {
    %c2_i32 = arith.constant 2 : i32
    %0 = arith.cmpi slt, %arg0, %c2_i32 : i32
    %c0_i32 = arith.constant 0 : i32
    %1 = arith.select %0, %arg1, %c0_i32 : i32
    %c0_i32_0 = arith.constant 0 : i32
    %c0_i32_1 = arith.constant 0 : i32
    return %1, %c0_i32_0 : i32, i32
  }
  func.func @transform_2(%arg0: i32, %arg1: i32) -> (i32, i32) {
    %c0_i32 = arith.constant 0 : i32
    %c0_i32_0 = arith.constant 0 : i32
    %c0_i32_1 = arith.constant 0 : i32
    return %c0_i32, %c0_i32_0 : i32, i32
  }
  func.func @transform_3(%arg0: i32, %arg1: i32) -> (i32, i32) {
    %c0_i32 = arith.constant 0 : i32
    %c0_i32_0 = arith.constant 0 : i32
    %c0_i32_1 = arith.constant 0 : i32
    return %c0_i32, %c0_i32_0 : i32, i32
  }
  func.func @transform_4(%arg0: i32, %arg1: i32) -> (i32, i32) {
    %c0_i32 = arith.constant 0 : i32
    %c0_i32_0 = arith.constant 0 : i32
    %c0_i32_1 = arith.constant 0 : i32
    return %c0_i32, %c0_i32_0 : i32, i32
  }
  func.func @transform_5(%arg0: i32, %arg1: i32) -> (i32, i32) {
    %c0_i32 = arith.constant 0 : i32
    %c0_i32_0 = arith.constant 0 : i32
    %c0_i32_1 = arith.constant 0 : i32
    return %c0_i32, %c0_i32_0 : i32, i32
  }
  func.func @transform_6(%arg0: i32, %arg1: i32) -> (i32, i32) {
    %c0_i32 = arith.constant 0 : i32
    %c0_i32_0 = arith.constant 0 : i32
    %c0_i32_1 = arith.constant 0 : i32
    return %c0_i32, %c0_i32_0 : i32, i32
  }
  func.func @transform_7(%arg0: i32, %arg1: i32) -> (i32, i32) {
    %c0_i32 = arith.constant 0 : i32
    %c0_i32_0 = arith.constant 0 : i32
    %c0_i32_1 = arith.constant 0 : i32
    return %c0_i32, %c0_i32_0 : i32, i32
  }
  func.func @transform_8(%arg0: i32, %arg1: i32) -> (i32, i32) {
    %c0_i32 = arith.constant 0 : i32
    %c0_i32_0 = arith.constant 0 : i32
    %c0_i32_1 = arith.constant 0 : i32
    return %c0_i32, %c0_i32_0 : i32, i32
  }
  func.func @transform_9(%arg0: i32, %arg1: i32) -> (i32, i32) {
    %c0_i32 = arith.constant 0 : i32
    %c0_i32_0 = arith.constant 0 : i32
    %c0_i32_1 = arith.constant 0 : i32
    return %c0_i32, %c0_i32_0 : i32, i32
  }
  func.func @transform_10(%arg0: i32, %arg1: i32) -> (i32, i32) {
    %c0_i32 = arith.constant 0 : i32
    %c0_i32_0 = arith.constant 0 : i32
    %c0_i32_1 = arith.constant 0 : i32
    return %c0_i32, %c0_i32_0 : i32, i32
  }
  func.func @transform_11(%arg0: i32, %arg1: i32) -> (i32, i32) {
    %c0_i32 = arith.constant 0 : i32
    %c0_i32_0 = arith.constant 0 : i32
    %c0_i32_1 = arith.constant 0 : i32
    return %c0_i32, %c0_i32_0 : i32, i32
  }
  func.func @transform_12(%arg0: i32, %arg1: i32) -> (i32, i32) {
    %c0_i32 = arith.constant 0 : i32
    %c0_i32_0 = arith.constant 0 : i32
    %c0_i32_1 = arith.constant 0 : i32
    return %c0_i32, %c0_i32_0 : i32, i32
  }
  func.func @transform_13(%arg0: i32, %arg1: i32) -> (i32, i32) {
    %c0_i32 = arith.constant 0 : i32
    %c0_i32_0 = arith.constant 0 : i32
    %c0_i32_1 = arith.constant 0 : i32
    return %c0_i32, %c0_i32_0 : i32, i32
  }
  func.func @transform_14(%arg0: i32, %arg1: i32) -> (i32, i32) {
    %c0_i32 = arith.constant 0 : i32
    %c0_i32_0 = arith.constant 0 : i32
    %c0_i32_1 = arith.constant 0 : i32
    return %c0_i32, %c0_i32_0 : i32, i32
  }
  func.func @transform_15(%arg0: i32, %arg1: i32) -> (i32, i32) {
    %c0_i32 = arith.constant 0 : i32
    %c0_i32_0 = arith.constant 0 : i32
    return %arg1, %c0_i32 : i32, i32
  }
}

</mosaic_0001>

<llo_original>
// kernel: tpu_custom_call.1
$region0: #{tpu_custom_call.1}
  #allocation0 [shape = 'u32[]', space=smem, size = 0x4, offset = 0x4, fixed_abs, tag = 'smem constant byte address 0x4 - core index']
  #allocation1 [shape = 'u32[144,128]{1,0:T(1,128)}', space=vmem, size = 0x12000, scoped, tag = 'internal scratch']
  #allocation2 [shape = 'bf16[32,128]{1,0:T(8,128)(2,1)}', space=vmem, size = 0x2000, scoped, tag = 'scratch operand']
  #allocation3 [shape = 'bf16[32,128]{1,0:T(8,128)(2,1)}', space=vmem, size = 0x2000, scoped, tag = 'scratch operand']
  #allocation4 [shape = 'f32[32,128]{1,0:T(8,128)}', space=vmem, size = 0x4000, scoped, tag = 'scratch operand']
  #allocation5 [shape = 'f32[2,128]{1,0:T(2,128)}', space=vmem, size = 0x400, scoped, tag = 'scratch operand']
  #allocation6 [shape = 'f32[2,128]{1,0:T(2,128)}', space=vmem, size = 0x400, scoped, tag = 'scratch operand']
  #allocation7 [shape = 'f32[2,128]{1,0:T(2,128)}', space=vmem, size = 0x400, scoped, tag = 'scratch operand']
  #allocation8 [shape = 'f32[2,128]{1,0:T(2,128)}', space=vmem, size = 0x400, scoped, tag = 'scratch operand']
  %s0 = inlined_call_operand.hbm [shape: f32[32,128], index: 0, kind: input, shape index: {}]
  %s1 = inlined_call_operand.vmem [shape: s8[32,32], index: 1, kind: input, shape index: {}]
  %s2 = inlined_call_operand.vmem [shape: f32[32,1], index: 2, kind: input, shape index: {}]
  %s3 = inlined_call_operand.vmem [shape: f32[32,1], index: 3, kind: input, shape index: {}]
  %s4 = inlined_call_operand.vmem [shape: f32[1,128], index: 4, kind: input, shape index: {}]
  %s5 = inlined_call_operand.vmem [shape: f32[1,128], index: 5, kind: input, shape index: {}]
  %s6 = inlined_call_operand.hbm [shape: f32[128,128], index: 6, kind: input, shape index: {}]
  %s7 = inlined_call_operand.vmem [shape: f32[1,128], index: 7, kind: input, shape index: {}]
  %s8 = inlined_call_operand.vmem [shape: f32[1,128], index: 8, kind: input, shape index: {}]
  %s9 = inlined_call_operand.vmem [shape: f32[1,128], index: 9, kind: input, shape index: {}]
  %s10 = inlined_call_operand.vmem [shape: bf16[128,128], index: 10, kind: input, shape index: {}]
  %s11 = inlined_call_operand.hbm [shape: bf16[128,128], index: 11, kind: input, shape index: {}]
  %s12 = inlined_call_operand.vmem [shape: f32[1,128], index: 12, kind: input, shape index: {}]
  %s13 = inlined_call_operand.vmem [shape: f32[1,128], index: 13, kind: input, shape index: {}]
  %s14 = inlined_call_operand.vmem [shape: f32[1,128], index: 14, kind: input, shape index: {}]
  %s15 = inlined_call_operand.hbm [shape: f32[32,128], index: 15, kind: output, shape index: {}]
  %s16 = sld [smem:[#allocation0]]
  $region129: #{tpu_custom_call.1} parent=0
    _
  %s18 = ssub.s32 1, %s16
  %s19 = scalar_select 0, %s18, %s16
  $region1: #{tpu_custom_call.1} parent=0
    #allocation9 [shape = 'u8[16384]{0}', space=vmem, size = 0x4000, scoped, tag = 'input window, operand 0, single buffered']
    #allocation10 [shape = 's32[2]{0}', space=sflag, size = 0x8, scoped, tag = 'scoped memory for tpu_custom_call.1']
    #allocation11 [shape = 's32[2]{0}', space=sflag, size = 0x8, scoped, tag = 'scoped memory for tpu_custom_call.1']
    #allocation12 [shape = 'u8[65536]{0}', space=vmem, size = 0x10000, scoped, tag = 'input window, operand 6, single buffered']
    #allocation13 [shape = 's32[1]{0}', space=sflag, size = 0x4, scoped, tag = 'scoped memory for tpu_custom_call.1']
    #allocation14 [shape = 'u8[32768]{0}', space=vmem, size = 0x8000, scoped, tag = 'input window, operand 11, single buffered']
    #allocation15 [shape = 'u8[16384]{0}', space=vmem, size = 0x4000, scoped, tag = 'output window, operand 0, single buffered']
    %20 = vsyncpa [#allocation10], 0
    %21 = vsyncpa [#allocation13], 0
    %22 = vsyncpa [#allocation11], 0
    loop: start=0, step=1, limit=5
    $region2: #{tpu_custom_call.1} parent=1 // loop_pre_header
      _
    $region3: #{tpu_custom_call.1} parent=1 // loop_header
      %s24 = sphi 0, %s28
      %p25 = scmp.ge.s32.totalorder %s24, 5
      %s31 = sphi 0, %s43
      %s32 = sphi 0, %s39
      %s33 = sphi 0, %s31
      %s34 = sphi 0, %s32
      %s35 = sphi 0, %s33
      %s36 = sphi 0, %s34
      %s44 = sphi 0, %s44
      %s46 = sphi 0, %s44
      %s47 = sphi 0, %s46
      %s61 = sphi 0, %s47
      %s71 = sphi 0, %s73
      %s74 = sphi 0, %s71
      %s75 = sphi 0, %s74
      %s91 = sphi 0, %s75
      %s95 = sphi 0, %s95
      %s97 = sphi 0, %s95
      %s98 = sphi 0, %s97
      %s112 = sphi 0, %s98
      %s116 = sphi 0, %s116
      %s118 = sphi 0, %s116
      %s119 = sphi 0, %s118
      %s133 = sphi 0, %s119
      %s137 = sphi 0, %s137
      %s139 = sphi 0, %s137
      %s140 = sphi 0, %s139
      %s154 = sphi 0, %s140
      %s158 = sphi 0, %s158
      %s160 = sphi 0, %s158
      %s161 = sphi 0, %s160
      %s175 = sphi 0, %s161
      %s179 = sphi 0, %s179
      %s181 = sphi 0, %s179
      %s182 = sphi 0, %s181
      %s196 = sphi 0, %s182
      %s200 = sphi 0, %s200
      %s202 = sphi 0, %s200
      %s203 = sphi 0, %s202
      %s217 = sphi 0, %s203
      %s221 = sphi 0, %s221
      %s223 = sphi 0, %s221
      %s224 = sphi 0, %s223
      %s238 = sphi 0, %s224
      %s242 = sphi 0, %s242
      %s244 = sphi 0, %s242
      %s245 = sphi 0, %s244
      %s259 = sphi 0, %s245
      %s263 = sphi 0, %s263
      %s265 = sphi 0, %s263
      %s266 = sphi 0, %s265
      %s280 = sphi 0, %s266
      %s284 = sphi 0, %s284
      %s286 = sphi 0, %s284
      %s287 = sphi 0, %s286
      %s301 = sphi 0, %s287
      %s305 = sphi 0, %s305
      %s307 = sphi 0, %s305
      %s308 = sphi 0, %s307
      %s322 = sphi 0, %s308
      %s326 = sphi 0, %s326
      %s328 = sphi 0, %s326
      %s329 = sphi 0, %s328
      %s343 = sphi 0, %s329
      %s347 = sphi 0, %s347
      %s349 = sphi 0, %s347
      %s350 = sphi 0, %s349
      %s364 = sphi 0, %s350
      %s370 = sphi 0, %s372
      %s373 = sphi 0, %s370
      %s374 = sphi 0, %s373
      %s390 = sphi 0, %s374
    $region4: #{tpu_custom_call.1} parent=1 // loop_header_branch
      %27 = sbr.rel (%p25) target = $region8
    $region5: #{tpu_custom_call.1} parent=1 // loop_body
      %s29 = ssub.s32 %s24, 1
      %s30 = ssub.s32 %s24, 2
      %s37 = sadd.s32 1, %s32
      %p38 = scmp.ge.s32.totalorder %s37, 1
      %s39 = scalar_select %p38, 0, %s37
      %s40 = sadd.s32 1, %s31
      %s41 = scalar_select %p38, %s40, %s31
      %p42 = scmp.ge.s32.totalorder %s41, 3
      %s43 = scalar_select %p42, 0, %s41
      %s45 = sadd.s32 %s44, 1
      %p48 = scmp.eq.s32.totalorder %s24, 2
      %p49 = scmp.ne.s32.totalorder %s44, %s46
      %p50 = scmp.eq.s32.totalorder %s24, 0
      %p51 = por %p49, %p50
      %p52 = scmp.ne.s32.totalorder %s44, %s46
      %p53 = scmp.eq.s32.totalorder %s29, 2
      %p54 = por %p52, %p53
      %p55 = scmp.ne.s32.totalorder %s46, %s47
      %p56 = scmp.eq.s32.totalorder %s29, 0
      %p57 = por %p55, %p56
      %p58 = scmp.ne.s32.totalorder %s46, %s47
      %p59 = scmp.eq.s32.totalorder %s30, 2
      %p60 = por %p58, %p59
      %p62 = scmp.ne.s32.totalorder %s47, %s61
      %p63 = scmp.eq.s32.totalorder %s30, 0
      %p64 = por %p62, %p63
      %p65 = scmp.lt.s32.totalorder %s31, 2
      %s66 = scalar_select %p65, %s32, 0
      %p67 = scmp.lt.s32.totalorder %s43, 2
      %s68 = scalar_select %p67, %s39, 0
      %s69 = ssub.s32 %s66, %s68
      %p70 = scmp.eq.s32.totalorder %s69, 0
      %s72 = sadd.s32 %s71, 1
      %s73 = scalar_select %p70, %s71, %s72
      %p76 = pneg %p70
      %p77 = scmp.eq.s32.totalorder %s24, 2
      %p78 = por %p76, %p77
      %p79 = scmp.ne.s32.totalorder %s71, %s74
      %p80 = scmp.eq.s32.totalorder %s24, 0
      %p81 = por %p79, %p80
      %p82 = scmp.ne.s32.totalorder %s71, %s74
      %p83 = scmp.eq.s32.totalorder %s29, 2
      %p84 = por %p82, %p83
      %p85 = scmp.ne.s32.totalorder %s74, %s75
      %p86 = scmp.eq.s32.totalorder %s29, 0
      %p87 = por %p85, %p86
      %p88 = scmp.ne.s32.totalorder %s74, %s75
      %p89 = scmp.eq.s32.totalorder %s30, 2
      %p90 = por %p88, %p89
      %p92 = scmp.ne.s32.totalorder %s75, %s91
      %p93 = scmp.eq.s32.totalorder %s30, 0
      %p94 = por %p92, %p93
      %s96 = sadd.s32 %s95, 1
      %p99 = scmp.eq.s32.totalorder %s24, 2
      %p100 = scmp.ne.s32.totalorder %s95, %s97
      %p101 = scmp.eq.s32.totalorder %s24, 0
      %p102 = por %p100, %p101
      %p103 = scmp.ne.s32.totalorder %s95, %s97
      %p104 = scmp.eq.s32.totalorder %s29, 2
      %p105 = por %p103, %p104
      %p106 = scmp.ne.s32.totalorder %s97, %s98
      %p107 = scmp.eq.s32.totalorder %s29, 0
      %p108 = por %p106, %p107
      %p109 = scmp.ne.s32.totalorder %s97, %s98
      %p110 = scmp.eq.s32.totalorder %s30, 2
      %p111 = por %p109, %p110
      %p113 = scmp.ne.s32.totalorder %s98, %s112
      %p114 = scmp.eq.s32.totalorder %s30, 0
      %p115 = por %p113, %p114
      %s117 = sadd.s32 %s116, 1
      %p120 = scmp.eq.s32.totalorder %s24, 2
      %p121 = scmp.ne.s32.totalorder %s116, %s118
      %p122 = scmp.eq.s32.totalorder %s24, 0
      %p123 = por %p121, %p122
      %p124 = scmp.ne.s32.totalorder %s116, %s118
      %p125 = scmp.eq.s32.totalorder %s29, 2
      %p126 = por %p124, %p125
      %p127 = scmp.ne.s32.totalorder %s118, %s119
      %p128 = scmp.eq.s32.totalorder %s29, 0
      %p129 = por %p127, %p128
      %p130 = scmp.ne.s32.totalorder %s118, %s119
      %p131 = scmp.eq.s32.totalorder %s30, 2
      %p132 = por %p130, %p131
      %p134 = scmp.ne.s32.totalorder %s119, %s133
      %p135 = scmp.eq.s32.totalorder %s30, 0
      %p136 = por %p134, %p135
      %s138 = sadd.s32 %s137, 1
      %p141 = scmp.eq.s32.totalorder %s24, 2
      %p142 = scmp.ne.s32.totalorder %s137, %s139
      %p143 = scmp.eq.s32.totalorder %s24, 0
      %p144 = por %p142, %p143
      %p145 = scmp.ne.s32.totalorder %s137, %s139
      %p146 = scmp.eq.s32.totalorder %s29, 2
      %p147 = por %p145, %p146
      %p148 = scmp.ne.s32.totalorder %s139, %s140
      %p149 = scmp.eq.s32.totalorder %s29, 0
      %p150 = por %p148, %p149
      %p151 = scmp.ne.s32.totalorder %s139, %s140
      %p152 = scmp.eq.s32.totalorder %s30, 2
      %p153 = por %p151, %p152
      %p155 = scmp.ne.s32.totalorder %s140, %s154
      %p156 = scmp.eq.s32.totalorder %s30, 0
      %p157 = por %p155, %p156
      %s159 = sadd.s32 %s158, 1
      %p162 = scmp.eq.s32.totalorder %s24, 2
      %p163 = scmp.ne.s32.totalorder %s158, %s160
      %p164 = scmp.eq.s32.totalorder %s24, 0
      %p165 = por %p163, %p164
      %p166 = scmp.ne.s32.totalorder %s158, %s160
      %p167 = scmp.eq.s32.totalorder %s29, 2
      %p168 = por %p166, %p167
      %p169 = scmp.ne.s32.totalorder %s160, %s161
      %p170 = scmp.eq.s32.totalorder %s29, 0
      %p171 = por %p169, %p170
      %p172 = scmp.ne.s32.totalorder %s160, %s161
      %p173 = scmp.eq.s32.totalorder %s30, 2
      %p174 = por %p172, %p173
      %p176 = scmp.ne.s32.totalorder %s161, %s175
      %p177 = scmp.eq.s32.totalorder %s30, 0
      %p178 = por %p176, %p177
      %s180 = sadd.s32 %s179, 1
      %p183 = scmp.eq.s32.totalorder %s24, 2
      %p184 = scmp.ne.s32.totalorder %s179, %s181
      %p185 = scmp.eq.s32.totalorder %s24, 0
      %p186 = por %p184, %p185
      %p187 = scmp.ne.s32.totalorder %s179, %s181
      %p188 = scmp.eq.s32.totalorder %s29, 2
      %p189 = por %p187, %p188
      %p190 = scmp.ne.s32.totalorder %s181, %s182
      %p191 = scmp.eq.s32.totalorder %s29, 0
      %p192 = por %p190, %p191
      %p193 = scmp.ne.s32.totalorder %s181, %s182
      %p194 = scmp.eq.s32.totalorder %s30, 2
      %p195 = por %p193, %p194
      %p197 = scmp.ne.s32.totalorder %s182, %s196
      %p198 = scmp.eq.s32.totalorder %s30, 0
      %p199 = por %p197, %p198
      %s201 = sadd.s32 %s200, 1
      %p204 = scmp.eq.s32.totalorder %s24, 2
      %p205 = scmp.ne.s32.totalorder %s200, %s202
      %p206 = scmp.eq.s32.totalorder %s24, 0
      %p207 = por %p205, %p206
      %p208 = scmp.ne.s32.totalorder %s200, %s202
      %p209 = scmp.eq.s32.totalorder %s29, 2
      %p210 = por %p208, %p209
      %p211 = scmp.ne.s32.totalorder %s202, %s203
      %p212 = scmp.eq.s32.totalorder %s29, 0
      %p213 = por %p211, %p212
      %p214 = scmp.ne.s32.totalorder %s202, %s203
      %p215 = scmp.eq.s32.totalorder %s30, 2
      %p216 = por %p214, %p215
      %p218 = scmp.ne.s32.totalorder %s203, %s217
      %p219 = scmp.eq.s32.totalorder %s30, 0
      %p220 = por %p218, %p219
      %s222 = sadd.s32 %s221, 1
      %p225 = scmp.eq.s32.totalorder %s24, 2
      %p226 = scmp.ne.s32.totalorder %s221, %s223
      %p227 = scmp.eq.s32.totalorder %s24, 0
      %p228 = por %p226, %p227
      %p229 = scmp.ne.s32.totalorder %s221, %s223
      %p230 = scmp.eq.s32.totalorder %s29, 2
      %p231 = por %p229, %p230
      %p232 = scmp.ne.s32.totalorder %s223, %s224
      %p233 = scmp.eq.s32.totalorder %s29, 0
      %p234 = por %p232, %p233
      %p235 = scmp.ne.s32.totalorder %s223, %s224
      %p236 = scmp.eq.s32.totalorder %s30, 2
      %p237 = por %p235, %p236
      %p239 = scmp.ne.s32.totalorder %s224, %s238
      %p240 = scmp.eq.s32.totalorder %s30, 0
      %p241 = por %p239, %p240
      %s243 = sadd.s32 %s242, 1
      %p246 = scmp.eq.s32.totalorder %s24, 2
      %p247 = scmp.ne.s32.totalorder %s242, %s244
      %p248 = scmp.eq.s32.totalorder %s24, 0
      %p249 = por %p247, %p248
      %p250 = scmp.ne.s32.totalorder %s242, %s244
      %p251 = scmp.eq.s32.totalorder %s29, 2
      %p252 = por %p250, %p251
      %p253 = scmp.ne.s32.totalorder %s244, %s245
      %p254 = scmp.eq.s32.totalorder %s29, 0
      %p255 = por %p253, %p254
      %p256 = scmp.ne.s32.totalorder %s244, %s245
      %p257 = scmp.eq.s32.totalorder %s30, 2
      %p258 = por %p256, %p257
      %p260 = scmp.ne.s32.totalorder %s245, %s259
      %p261 = scmp.eq.s32.totalorder %s30, 0
      %p262 = por %p260, %p261
      %s264 = sadd.s32 %s263, 1
      %p267 = scmp.eq.s32.totalorder %s24, 2
      %p268 = scmp.ne.s32.totalorder %s263, %s265
      %p269 = scmp.eq.s32.totalorder %s24, 0
      %p270 = por %p268, %p269
      %p271 = scmp.ne.s32.totalorder %s263, %s265
      %p272 = scmp.eq.s32.totalorder %s29, 2
      %p273 = por %p271, %p272
      %p274 = scmp.ne.s32.totalorder %s265, %s266
      %p275 = scmp.eq.s32.totalorder %s29, 0
      %p276 = por %p274, %p275
      %p277 = scmp.ne.s32.totalorder %s265, %s266
      %p278 = scmp.eq.s32.totalorder %s30, 2
      %p279 = por %p277, %p278
      %p281 = scmp.ne.s32.totalorder %s266, %s280
      %p282 = scmp.eq.s32.totalorder %s30, 0
      %p283 = por %p281, %p282
      %s285 = sadd.s32 %s284, 1
      %p288 = scmp.eq.s32.totalorder %s24, 2
      %p289 = scmp.ne.s32.totalorder %s284, %s286
      %p290 = scmp.eq.s32.totalorder %s24, 0
      %p291 = por %p289, %p290
      %p292 = scmp.ne.s32.totalorder %s284, %s286
      %p293 = scmp.eq.s32.totalorder %s29, 2
      %p294 = por %p292, %p293
      %p295 = scmp.ne.s32.totalorder %s286, %s287
      %p296 = scmp.eq.s32.totalorder %s29, 0
      %p297 = por %p295, %p296
      %p298 = scmp.ne.s32.totalorder %s286, %s287
      %p299 = scmp.eq.s32.totalorder %s30, 2
      %p300 = por %p298, %p299
      %p302 = scmp.ne.s32.totalorder %s287, %s301
      %p303 = scmp.eq.s32.totalorder %s30, 0
      %p304 = por %p302, %p303
      %s306 = sadd.s32 %s305, 1
      %p309 = scmp.eq.s32.totalorder %s24, 2
      %p310 = scmp.ne.s32.totalorder %s305, %s307
      %p311 = scmp.eq.s32.totalorder %s24, 0
      %p312 = por %p310, %p311
      %p313 = scmp.ne.s32.totalorder %s305, %s307
      %p314 = scmp.eq.s32.totalorder %s29, 2
      %p315 = por %p313, %p314
      %p316 = scmp.ne.s32.totalorder %s307, %s308
      %p317 = scmp.eq.s32.totalorder %s29, 0
      %p318 = por %p316, %p317
      %p319 = scmp.ne.s32.totalorder %s307, %s308
      %p320 = scmp.eq.s32.totalorder %s30, 2
      %p321 = por %p319, %p320
      %p323 = scmp.ne.s32.totalorder %s308, %s322
      %p324 = scmp.eq.s32.totalorder %s30, 0
      %p325 = por %p323, %p324
      %s327 = sadd.s32 %s326, 1
      %p330 = scmp.eq.s32.totalorder %s24, 2
      %p331 = scmp.ne.s32.totalorder %s326, %s328
      %p332 = scmp.eq.s32.totalorder %s24, 0
      %p333 = por %p331, %p332
      %p334 = scmp.ne.s32.totalorder %s326, %s328
      %p335 = scmp.eq.s32.totalorder %s29, 2
      %p336 = por %p334, %p335
      %p337 = scmp.ne.s32.totalorder %s328, %s329
      %p338 = scmp.eq.s32.totalorder %s29, 0
      %p339 = por %p337, %p338
      %p340 = scmp.ne.s32.totalorder %s328, %s329
      %p341 = scmp.eq.s32.totalorder %s30, 2
      %p342 = por %p340, %p341
      %p344 = scmp.ne.s32.totalorder %s329, %s343
      %p345 = scmp.eq.s32.totalorder %s30, 0
      %p346 = por %p344, %p345
      %s348 = sadd.s32 %s347, 1
      %p351 = scmp.eq.s32.totalorder %s24, 2
      %p352 = scmp.ne.s32.totalorder %s347, %s349
      %p353 = scmp.eq.s32.totalorder %s24, 0
      %p354 = por %p352, %p353
      %p355 = scmp.ne.s32.totalorder %s347, %s349
      %p356 = scmp.eq.s32.totalorder %s29, 2
      %p357 = por %p355, %p356
      %p358 = scmp.ne.s32.totalorder %s349, %s350
      %p359 = scmp.eq.s32.totalorder %s29, 0
      %p360 = por %p358, %p359
      %p361 = scmp.ne.s32.totalorder %s349, %s350
      %p362 = scmp.eq.s32.totalorder %s30, 2
      %p363 = por %p361, %p362
      %p365 = scmp.ne.s32.totalorder %s350, %s364
      %p366 = scmp.eq.s32.totalorder %s30, 0
      %p367 = por %p365, %p366
      %s368 = ssub.s32 %s32, %s39
      %p369 = scmp.eq.s32.totalorder %s368, 0
      %s371 = sadd.s32 %s370, 1
      %s372 = scalar_select %p369, %s370, %s371
      %p375 = pneg %p369
      %p376 = scmp.eq.s32.totalorder %s24, 2
      %p377 = por %p375, %p376
      %p378 = scmp.ne.s32.totalorder %s370, %s373
      %p379 = scmp.eq.s32.totalorder %s24, 0
      %p380 = por %p378, %p379
      %p381 = scmp.ne.s32.totalorder %s370, %s373
      %p382 = scmp.eq.s32.totalorder %s29, 2
      %p383 = por %p381, %p382
      %p384 = scmp.ne.s32.totalorder %s373, %s374
      %p385 = scmp.eq.s32.totalorder %s29, 0
      %p386 = por %p384, %p385
      %p387 = scmp.ne.s32.totalorder %s373, %s374
      %p388 = scmp.eq.s32.totalorder %s30, 2
      %p389 = por %p387, %p388
      %p391 = scmp.ne.s32.totalorder %s374, %s390
      %p392 = scmp.eq.s32.totalorder %s30, 0
      %p393 = por %p391, %p392
      %p394 = scmp.le.s32.totalorder 1, %s24
      %p395 = scmp.lt.s32.totalorder %s24, 4
      %p396 = pnand %p394, %p395
      %p397 = pneg %p396
      // Predicated region
      $region9: #{tpu_custom_call.1} parent=5 // pred_check
        _
      $region10: #{tpu_custom_call.1} parent=5 // pred_check_branch
        %399 = sbr.rel (%p396) target = $region12
      $region11: #{tpu_custom_call.1} parent=5 // pred_region
        %s400 = ssub.s32 %s24, 1
        // Predicated region
        $region13: #{tpu_custom_call.1} parent=11 // pred_check
          %p401 = pneg %p57
        $region14: #{tpu_custom_call.1} parent=11 // pred_check_branch
          %403 = sbr.rel (%p401) target = $region16
        $region15: #{tpu_custom_call.1} parent=11 // pred_region
          %s405 = ssub.s32 512, 512
          %406 = vsyncadd [#allocation10], %s405
          %s407 = sshll.u32 [#allocation9], 4
          %s408 = int_to_ptr.vmem [resolvable:$true] %s407
          %413 = dma.hbm_to_vmem [thread:$0]  %s0, 512, %s408, [#allocation10], 128, 128, 8
        $region16: #{tpu_custom_call.1} parent=11 // pred_fallthru
          _
        // Predicated region
        $region17: #{tpu_custom_call.1} parent=11 // pred_check
          %p414 = pneg %p108
        $region18: #{tpu_custom_call.1} parent=11 // pred_check_branch
          %416 = sbr.rel (%p414) target = $region20
        $region19: #{tpu_custom_call.1} parent=11 // pred_region
          _
        $region20: #{tpu_custom_call.1} parent=11 // pred_fallthru
          _
        // Predicated region
        $region21: #{tpu_custom_call.1} parent=11 // pred_check
          %p417 = pneg %p129
        $region22: #{tpu_custom_call.1} parent=11 // pred_check_branch
          %419 = sbr.rel (%p417) target = $region24
        $region23: #{tpu_custom_call.1} parent=11 // pred_region
          _
        $region24: #{tpu_custom_call.1} parent=11 // pred_fallthru
          _
        // Predicated region
        $region25: #{tpu_custom_call.1} parent=11 // pred_check
          %p420 = pneg %p150
        $region26: #{tpu_custom_call.1} parent=11 // pred_check_branch
          %422 = sbr.rel (%p420) target = $region28
        $region27: #{tpu_custom_call.1} parent=11 // pred_region
          _
        $region28: #{tpu_custom_call.1} parent=11 // pred_fallthru
          _
        // Predicated region
        $region29: #{tpu_custom_call.1} parent=11 // pred_check
          %p423 = pneg %p171
        $region30: #{tpu_custom_call.1} parent=11 // pred_check_branch
          %425 = sbr.rel (%p423) target = $region32
        $region31: #{tpu_custom_call.1} parent=11 // pred_region
          _
        $region32: #{tpu_custom_call.1} parent=11 // pred_fallthru
          _
        // Predicated region
        $region33: #{tpu_custom_call.1} parent=11 // pred_check
          %p426 = pneg %p192
        $region34: #{tpu_custom_call.1} parent=11 // pred_check_branch
          %428 = sbr.rel (%p426) target = $region36
        $region35: #{tpu_custom_call.1} parent=11 // pred_region
          %s430 = ssub.s32 2048, 2048
          %431 = vsyncadd [#allocation13], %s430
          %s432 = sshll.u32 [#allocation12], 4
          %s433 = int_to_ptr.vmem [resolvable:$true] %s432
          %438 = dma.hbm_to_vmem [thread:$0]  %s6, 2048, %s433, [#allocation13], 128, 128, 8
        $region36: #{tpu_custom_call.1} parent=11 // pred_fallthru
          _
        // Predicated region
        $region37: #{tpu_custom_call.1} parent=11 // pred_check
          %p439 = pneg %p213
        $region38: #{tpu_custom_call.1} parent=11 // pred_check_branch
          %441 = sbr.rel (%p439) target = $region40
        $region39: #{tpu_custom_call.1} parent=11 // pred_region
          _
        $region40: #{tpu_custom_call.1} parent=11 // pred_fallthru
          _
        // Predicated region
        $region41: #{tpu_custom_call.1} parent=11 // pred_check
          %p442 = pneg %p234
        $region42: #{tpu_custom_call.1} parent=11 // pred_check_branch
          %444 = sbr.rel (%p442) target = $region44
        $region43: #{tpu_custom_call.1} parent=11 // pred_region
          _
        $region44: #{tpu_custom_call.1} parent=11 // pred_fallthru
          _
        // Predicated region
        $region45: #{tpu_custom_call.1} parent=11 // pred_check
          %p445 = pneg %p255
        $region46: #{tpu_custom_call.1} parent=11 // pred_check_branch
          %447 = sbr.rel (%p445) target = $region48
        $region47: #{tpu_custom_call.1} parent=11 // pred_region
          _
        $region48: #{tpu_custom_call.1} parent=11 // pred_fallthru
          _
        // Predicated region
        $region49: #{tpu_custom_call.1} parent=11 // pred_check
          %p448 = pneg %p276
        $region50: #{tpu_custom_call.1} parent=11 // pred_check_branch
          %450 = sbr.rel (%p448) target = $region52
        $region51: #{tpu_custom_call.1} parent=11 // pred_region
          _
        $region52: #{tpu_custom_call.1} parent=11 // pred_fallthru
          _
        // Predicated region
        $region53: #{tpu_custom_call.1} parent=11 // pred_check
          %p451 = pneg %p297
        $region54: #{tpu_custom_call.1} parent=11 // pred_check_branch
          %453 = sbr.rel (%p451) target = $region56
        $region55: #{tpu_custom_call.1} parent=11 // pred_region
          %s455 = ssub.s32 1024, 1024
          %456 = vsyncadd [#allocation13], %s455
          %s457 = sshll.u32 [#allocation14], 4
          %s458 = int_to_ptr.vmem [resolvable:$true] %s457
          %463 = dma.hbm_to_vmem [thread:$0]  %s11, 1024, %s458, [#allocation13], 64, 64, 4
        $region56: #{tpu_custom_call.1} parent=11 // pred_fallthru
          _
        // Predicated region
        $region57: #{tpu_custom_call.1} parent=11 // pred_check
          %p464 = pneg %p318
        $region58: #{tpu_custom_call.1} parent=11 // pred_check_branch
          %466 = sbr.rel (%p464) target = $region60
        $region59: #{tpu_custom_call.1} parent=11 // pred_region
          _
        $region60: #{tpu_custom_call.1} parent=11 // pred_fallthru
          _
        // Predicated region
        $region61: #{tpu_custom_call.1} parent=11 // pred_check
          %p467 = pneg %p339
        $region62: #{tpu_custom_call.1} parent=11 // pred_check_branch
          %469 = sbr.rel (%p467) target = $region64
        $region63: #{tpu_custom_call.1} parent=11 // pred_region
          _
        $region64: #{tpu_custom_call.1} parent=11 // pred_fallthru
          _
        // Predicated region
        $region65: #{tpu_custom_call.1} parent=11 // pred_check
          %p470 = pneg %p360
        $region66: #{tpu_custom_call.1} parent=11 // pred_check_branch
          %472 = sbr.rel (%p470) target = $region68
        $region67: #{tpu_custom_call.1} parent=11 // pred_region
          _
        $region68: #{tpu_custom_call.1} parent=11 // pred_fallthru
          _
      $region12: #{tpu_custom_call.1} parent=5 // pred_fallthru
        _
      %p473 = scmp.lt.s32.totalorder %s24, 3
      // Predicated region
      $region69: #{tpu_custom_call.1} parent=5 // pred_check
        %p474 = pneg %p473
      $region70: #{tpu_custom_call.1} parent=5 // pred_check_branch
        %476 = sbr.rel (%p474) target = $region72
      $region71: #{tpu_custom_call.1} parent=5 // pred_region
        // Predicated region
        $region73: #{tpu_custom_call.1} parent=71 // pred_check
          %p477 = pneg %p81
        $region74: #{tpu_custom_call.1} parent=71 // pred_check_branch
          %479 = sbr.rel (%p477) target = $region76
        $region75: #{tpu_custom_call.1} parent=71 // pred_region
          %p480 = scmp.lt.s32.totalorder %s31, 2
          %s481 = scalar_select %p480, %s32, 0
          %p482 = scmp.lt.s32.totalorder %s481, 0
          %s483 = scalar_select %p482, %s481, 0
          %s484 = smul.addr %s483, 8
          %s485 = scalar_lea.vmem %s1, %s484
          %p486 = scmp.lt.s32.totalorder %s31, 2
          %s487 = scalar_select %p486, %s32, 0
        $region76: #{tpu_custom_call.1} parent=71 // pred_fallthru
          _
      $region72: #{tpu_custom_call.1} parent=5 // pred_fallthru
        _
      %p488 = scmp.le.s32.totalorder 1, %s24
      %p489 = scmp.lt.s32.totalorder %s24, 4
      %p490 = pnand %p488, %p489
      %p491 = pneg %p490
      // Predicated region
      $region77: #{tpu_custom_call.1} parent=5 // pred_check
        _
      $region78: #{tpu_custom_call.1} parent=5 // pred_check_branch
        %493 = sbr.rel (%p490) target = $region80
      $region79: #{tpu_custom_call.1} parent=5 // pred_region
        %s494 = ssub.s32 %s24, 1
        // Predicated region
        $region81: #{tpu_custom_call.1} parent=79 // pred_check
          %p495 = pneg %p57
        $region82: #{tpu_custom_call.1} parent=79 // pred_check_branch
          %497 = sbr.rel (%p495) target = $region84
        $region83: #{tpu_custom_call.1} parent=79 // pred_region
          %498 = dma.done [#allocation10], 512
        $region84: #{tpu_custom_call.1} parent=79 // pred_fallthru
          _
        // Predicated region
        $region85: #{tpu_custom_call.1} parent=79 // pred_check
          %p499 = pneg %p192
        $region86: #{tpu_custom_call.1} parent=79 // pred_check_branch
          %501 = sbr.rel (%p499) target = $region88
        $region87: #{tpu_custom_call.1} parent=79 // pred_region
          %502 = dma.done [#allocation13], 2048
        $region88: #{tpu_custom_call.1} parent=79 // pred_fallthru
          _
        // Predicated region
        $region89: #{tpu_custom_call.1} parent=79 // pred_check
          %p503 = pneg %p297
        $region90: #{tpu_custom_call.1} parent=79 // pred_check_branch
          %505 = sbr.rel (%p503) target = $region92
        $region91: #{tpu_custom_call.1} parent=79 // pred_region
          %506 = dma.done [#allocation13], 1024
        $region92: #{tpu_custom_call.1} parent=79 // pred_fallthru
          _
        %p507 = pneg %p57
        %p508 = pneg %p54
        %p509 = scmp.lt.s32.totalorder %s33, 2
        %s510 = scalar_select %p509, %s34, 0
        %p511 = scmp.lt.s32.totalorder %s510, 0
        %s512 = scalar_select %p511, %s510, 0
        %s513 = smul.addr %s512, 8
        %s514 = scalar_lea.vmem %s1, %s513
        %p515 = pneg %p87
        %p516 = pneg %p84
        %p517 = pneg %p108
        %p518 = pneg %p105
        %p519 = pneg %p129
        %p520 = pneg %p126
        %p521 = pneg %p150
        %p522 = pneg %p147
        %p523 = pneg %p171
        %p524 = pneg %p168
        %p525 = pneg %p192
        %p526 = pneg %p189
        %p527 = pneg %p213
        %p528 = pneg %p210
        %p529 = pneg %p234
        %p530 = pneg %p231
        %p531 = pneg %p255
        %p532 = pneg %p252
        %p533 = pneg %p276
        %p534 = pneg %p273
        %p535 = pneg %p297
        %p536 = pneg %p294
        %p537 = pneg %p318
        %p538 = pneg %p315
        %p539 = pneg %p339
        %p540 = pneg %p336
        %p541 = pneg %p360
        %p542 = pneg %p357
        %p543 = pneg %p386
        %p544 = pneg %p383
        %p545 = scmp.lt.s32.totalorder %s33, 2
        %s546 = scalar_select %p545, %s34, 0
        %p547 = scmp.lt.s32.totalorder %s546, 0
        %s548 = scalar_select %p547, %s546, 0
        %s549 = smul.addr %s548, 8
        %s550 = scalar_lea.vmem %s1, %s549
        %p551 = scmp.lt.s32.totalorder %s33, 2
        %s552 = scalar_select %p551, %s34, 0
        %s553 = smul.u32 4, %s34
        %s555 = smul.u32 %s34, 32
        %v556 = vlaneseq
        %v557 = vshrl.u32 %v556, 7
        %v558 = vadd.s32 %v557, 8
        %v559 = vadd.s32 %v557, 16
        %v560 = vadd.s32 %v557, 24
        %v561 = vstv %s555
        %v562 = vadd.s32 %v561, %v557
        %v563 = vadd.s32 %v561, %v558
        %v564 = vadd.s32 %v561, %v559
        %v565 = vadd.s32 %v561, %v560
        %vm566 = vcmp.lt.s32.totalorder %v562, 32
        %vm567 = vcmp.lt.s32.totalorder %v563, 32
        %vm568 = vcmp.lt.s32.totalorder %v564, 32
        %vm569 = vcmp.lt.s32.totalorder %v565, 32
        %v570 = vsel %vm566, 1, 0
        %v571 = vsel %vm567, 1, 0
        %v572 = vsel %vm568, 1, 0
        %v573 = vsel %vm569, 1, 0
        %v574 = vcvt.s32.f32 %v570
        %v575 = vcvt.s32.f32 %v571
        %v576 = vcvt.s32.f32 %v572
        %v577 = vcvt.s32.f32 %v573
        %p578 = scmp.eq.s32.totalorder %s33, 0
        // Predicated region
        $region93: #{tpu_custom_call.1} parent=79 // pred_check
          %p579 = pneg %p578
        $region94: #{tpu_custom_call.1} parent=79 // pred_check_branch
          %581 = sbr.rel (%p579) target = $region96
        $region95: #{tpu_custom_call.1} parent=79 // pred_region
          %p582 = scmp.eq.s32.totalorder %s34, 0
          // Predicated region
          $region97: #{tpu_custom_call.1} parent=95 // pred_check
            %p583 = pneg %p582
          $region98: #{tpu_custom_call.1} parent=95 // pred_check_branch
            %585 = sbr.rel (%p583) target = $region100
          $region99: #{tpu_custom_call.1} parent=95 // pred_region
            %v586 = vld [vmem:[#allocation9] sm:$0xff]
            %v587 = vld [vmem:[#allocation9 + $0x8] sm:$0xff]
            %v588 = vld [vmem:[#allocation9 + $0x10] sm:$0xff]
            %v589 = vld [vmem:[#allocation9 + $0x18] sm:$0xff]
            %v590 = vadd.f32 %v586, %v587
            %v591 = vadd.f32 %v590, %v588
            %v592 = vadd.f32 %v591, %v589
            %v593 = vrot.slane %v592, 4
            %v594 = vadd.f32 %v592, %v593
            %v595 = vrot.slane %v594, 2
            %v596 = vadd.f32 %v594, %v595
            %v597 = vrot.slane %v596, 1
            %v598 = vadd.f32 %v596, %v597
            %v599 = vmul.f32 %v598, 0.03125
            %v600 = vmul.f32 %v586, %v586
            %v601 = vmul.f32 %v587, %v587
            %v602 = vmul.f32 %v588, %v588
            %v603 = vmul.f32 %v589, %v589
            %v604 = vadd.f32 %v600, %v601
            %v605 = vadd.f32 %v604, %v602
            %v606 = vadd.f32 %v605, %v603
            %v607 = vrot.slane %v606, 4
            %v608 = vadd.f32 %v606, %v607
            %v609 = vrot.slane %v608, 2
            %v610 = vadd.f32 %v608, %v609
            %v611 = vrot.slane %v610, 1
            %v612 = vadd.f32 %v610, %v611
            %v613 = vmul.f32 %v612, 0.03125
            %v614 = vmul.f32 %v599, %v599
            %v615 = vsub.f32 %v613, %v614
            %v616 = vsub.f32 %v586, %v599
            %v617 = vsub.f32 %v587, %v599
            %v618 = vsub.f32 %v588, %v599
            %v619 = vsub.f32 %v589, %v599
            %v620 = vadd.f32 %v615, 1e-05
            %v621 = vrsqrt.pop %v620
            %v622 = vld [vmem:[%s4] sm:$0x1]
            %v623 = vmul.f32 %v621, %v622
            %v624 = vlaneseq
            %v625 = vshrl.u32 %v624, 7
            %v626 = vsub.s32 0, %v625
            %v627 = vrot.slane %v623, %v626
            %v628 = vmul.f32 %v616, %v627
            %v629 = vmul.f32 %v617, %v627
            %v630 = vmul.f32 %v618, %v627
            %v631 = vmul.f32 %v619, %v627
            %v632 = vld [vmem:[%s5] sm:$0x1]
            %v634 = vlaneseq
            %v635 = vshrl.u32 %v634, 7
            %v636 = vsub.s32 0, %v635
            %v637 = vrot.slane %v632, %v636
            %v639 = vadd.f32 %v628, %v637
            %v640 = vadd.f32 %v629, %v637
            %v641 = vadd.f32 %v630, %v637
            %v642 = vadd.f32 %v631, %v637
            %v643 = vld [vmem:[%s2] sm:$0xff]
            %v644 = vld [vmem:[%s2 + $0x8] sm:$0xff]
            %v645 = vld [vmem:[%s2 + $0x10] sm:$0xff]
            %v646 = vld [vmem:[%s2 + $0x18] sm:$0xff]
            %648 = vset.pattern.permute.xlu0 0
            %649 = vperm.xlu0 %648, %v643
            %v650 = vpop.permute.xlu0 %649
            %653 = vset.pattern.permute.xlu0 0
            %654 = vperm.xlu0 %653, %v644
            %v655 = vpop.permute.xlu0 %654
            %658 = vset.pattern.permute.xlu0 0
            %659 = vperm.xlu0 %658, %v645
            %v660 = vpop.permute.xlu0 %659
            %663 = vset.pattern.permute.xlu0 0
            %664 = vperm.xlu0 %663, %v646
            %v665 = vpop.permute.xlu0 %664
            %v667 = vmul.f32 %v650, %v639
            %v668 = vmul.f32 %v655, %v640
            %v669 = vmul.f32 %v660, %v641
            %v670 = vmul.f32 %v665, %v642
            %v671 = vld [vmem:[#allocation12] sm:$0xff]
            %v672 = vld [vmem:[#allocation12 + $0x8] sm:$0xff]
            %v673 = vld [vmem:[#allocation12 + $0x10] sm:$0xff]
            %v674 = vld [vmem:[#allocation12 + $0x18] sm:$0xff]
            %v675 = vld [vmem:[#allocation12 + $0x20] sm:$0xff]
            %v676 = vld [vmem:[#allocation12 + $0x28] sm:$0xff]
            %v677 = vld [vmem:[#allocation12 + $0x30] sm:$0xff]
            %v678 = vld [vmem:[#allocation12 + $0x38] sm:$0xff]
            %v679 = vld [vmem:[#allocation12 + $0x40] sm:$0xff]
            %v680 = vld [vmem:[#allocation12 + $0x48] sm:$0xff]
            %v681 = vld [vmem:[#allocation12 + $0x50] sm:$0xff]
            %v682 = vld [vmem:[#allocation12 + $0x58] sm:$0xff]
            %v683 = vld [vmem:[#allocation12 + $0x60] sm:$0xff]
            %v684 = vld [vmem:[#allocation12 + $0x68] sm:$0xff]
            %v685 = vld [vmem:[#allocation12 + $0x70] sm:$0xff]
            %v686 = vld [vmem:[#allocation12 + $0x78] sm:$0xff]
            %687 = vmatprep.subr.mxu0 0.0
            %688 = vmatpush1.msra.mxu0 %v686
            %689 = vmatprep.subr.mxu0 0.0
            %690 = vmatpush1.msra.mxu0 %v685
            %691 = vmatprep.subr.mxu0 0.0
            %692 = vmatpush1.msra.mxu0 %v684
            %693 = vmatprep.subr.mxu0 0.0
            %694 = vmatpush1.msra.mxu0 %v683
            %695 = vmatprep.subr.mxu0 0.0
            %696 = vmatpush1.msra.mxu0 %v682
            %697 = vmatprep.subr.mxu0 0.0
            %698 = vmatpush1.msra.mxu0 %v681
            %699 = vmatprep.subr.mxu0 0.0
            %700 = vmatpush1.msra.mxu0 %v680
            %701 = vmatprep.subr.mxu0 0.0
            %702 = vmatpush1.msra.mxu0 %v679
            %703 = vmatprep.subr.mxu0 0.0
            %704 = vmatpush1.msra.mxu0 %v678
            %705 = vmatprep.subr.mxu0 0.0
            %706 = vmatpush1.msra.mxu0 %v677
            %707 = vmatprep.subr.mxu0 0.0
            %708 = vmatpush1.msra.mxu0 %v676
            %709 = vmatprep.subr.mxu0 0.0
            %710 = vmatpush1.msra.mxu0 %v675
            %711 = vmatprep.subr.mxu0 0.0
            %712 = vmatpush1.msra.mxu0 %v674
            %713 = vmatprep.subr.mxu0 0.0
            %714 = vmatpush1.msra.mxu0 %v673
            %715 = vmatprep.subr.mxu0 0.0
            %716 = vmatpush1.msra.mxu0 %v672
            %717 = vmatprep.subr.mxu0 0.0
            %718 = vmatpush1.msra.mxu0 %v671
            %719 = vmatprep.subr.mxu0 0.0
            %720 = vmatpush2.msra.mxu0 0.0
            %721 = vmatprep.subr.mxu0 0.0
            %722 = vmatpush2.msra.mxu0 0.0
            %723 = vmatprep.subr.mxu0 0.0
            %724 = vmatpush2.msra.mxu0 0.0
            %725 = vmatprep.subr.mxu0 0.0
            %726 = vmatpush2.msra.mxu0 0.0
            %727 = vmatprep.subr.mxu0 0.0
            %728 = vmatpush2.msra.mxu0 0.0
            %729 = vmatprep.subr.mxu0 0.0
            %730 = vmatpush2.msra.mxu0 0.0
            %731 = vmatprep.subr.mxu0 0.0
            %732 = vmatpush2.msra.mxu0 0.0
            %733 = vmatprep.subr.mxu0 0.0
            %734 = vmatpush2.msra.mxu0 0.0
            %735 = vmatprep.subr.mxu0 0.0
            %736 = vmatpush2.msra.mxu0 0.0
            %737 = vmatprep.subr.mxu0 0.0
            %738 = vmatpush2.msra.mxu0 0.0
            %739 = vmatprep.subr.mxu0 0.0
            %740 = vmatpush2.msra.mxu0 0.0
            %741 = vmatprep.subr.mxu0 0.0
            %742 = vmatpush2.msra.mxu0 0.0
            %743 = vmatprep.subr.mxu0 0.0
            %744 = vmatpush2.msra.mxu0 0.0
            %745 = vmatprep.subr.mxu0 0.0
            %746 = vmatpush2.msra.mxu0 0.0
            %747 = vmatprep.subr.mxu0 0.0
            %748 = vmatpush2.msra.mxu0 0.0
            %749 = vmatprep.subr.mxu0 0.0
            %750 = vmatpush2.msra.mxu0 0.0
            %751 = vmatprep.mubr.f32.mxu0 0.0
            %752 = vmatmul.mubr.f32.gmra.mxu0 %v667
            %v753 = vpop.f32.mrf.mxu0
            %v754 = vadd.f32 0.0, %v753
            %v755 = vpop.f32.mrf.mxu0
            %756 = vmatprep.mubr.f32.mxu0 0.0
            %757 = vmatmul.mubr.f32.gmra.mxu0 %v668
            %v758 = vpop.f32.mrf.mxu0
            %v759 = vadd.f32 0.0, %v758
            %v760 = vpop.f32.mrf.mxu0
            %761 = vmatprep.mubr.f32.mxu0 0.0
            %762 = vmatmul.mubr.f32.gmra.mxu0 %v669
            %v763 = vpop.f32.mrf.mxu0
            %v764 = vadd.f32 0.0, %v763
            %v765 = vpop.f32.mrf.mxu0
            %766 = vmatprep.mubr.f32.mxu0 0.0
            %767 = vmatmul.mubr.f32.gmra.mxu0 %v670
            %v768 = vpop.f32.mrf.mxu0
            %v769 = vadd.f32 0.0, %v768
            %v770 = vpop.f32.mrf.mxu0
            %771 = vdwg.mxu0
            %v772 = vpack.c.bf16 %v759, %v754
            %v773 = vpack.c.bf16 %v769, %v764
            %v776 = vunpack.c.l.b16 %v772
            %v777 = vunpack.c.h.b16 %v772
            %v778 = vunpack.c.l.b16 %v773
            %v779 = vunpack.c.h.b16 %v773
            %v780 = vpack.c.b16 %v776, %v776
            %v781 = vpack.c.b16 %v777, %v777
            %v782 = vpack.c.b16 %v778, %v778
            %v783 = vpack.c.b16 %v779, %v779
            %788 = vst [vmem:[#allocation2] sm:$0xf] %v780
            %789 = vst [vmem:[#allocation2 + $0x4] sm:$0xf] %v781
            %790 = vst [vmem:[#allocation2 + $0x8] sm:$0xf] %v782
            %791 = vst [vmem:[#allocation2 + $0xc] sm:$0xf] %v783
            %792 = vst [vmem:[#allocation5] sm:$0x3] 0.0
            %793 = vst [vmem:[#allocation6] sm:$0x3] 0.0
          $region100: #{tpu_custom_call.1} parent=95 // pred_fallthru
            _
          %v794 = vld [vmem:[%s550] sm:$0xff]
          %v795 = vunpack.c.l.s8.bf16 %v794
          %v796 = vunpack.c.h.s8.bf16 %v794
          %v797 = vld [vmem:[#allocation2] sm:$0xf]
          %v798 = vld [vmem:[#allocation2 + $0x4] sm:$0xf]
          %v799 = vld [vmem:[#allocation2 + $0x8] sm:$0xf]
          %v800 = vld [vmem:[#allocation2 + $0xc] sm:$0xf]
          %s801 = sshra.s32 %s555, 3
          %s802 = sand.u32 %s555, 7
          %s803 = smul.addr %s801, 4
          %s804 = scalar_lea.vmem [#allocation2], %s803
          %v805 = vld [vmem:[%s804] sm:$0xf]
          %v806 = vld [vmem:[%s804 + $0x4] sm:$0xf]
          %v807 = vld [vmem:[%s804 + $0x8] sm:$0xf]
          %v808 = vld [vmem:[%s804 + $0xc] sm:$0xf]
          %v809 = vunpack.c.l.bf16 %v805
          %v810 = vunpack.c.l.bf16 %v806
          %v811 = vunpack.c.l.bf16 %v807
          %v812 = vunpack.c.l.bf16 %v808
          %s813 = scalar_lea.vmem %s2, %s555
          %v814 = vld [vmem:[%s813] sm:$0xff]
          %v815 = vld [vmem:[%s813 + $0x8] sm:$0xff]
          %v816 = vld [vmem:[%s813 + $0x10] sm:$0xff]
          %v817 = vld [vmem:[%s813 + $0x18] sm:$0xff]
          %v822 = vunpack.c.l.b16 %v797
          %v823 = vunpack.c.l.b16 %v798
          %v824 = vunpack.c.l.b16 %v799
          %v825 = vunpack.c.l.b16 %v800
          %v826 = vpack.c.b16 %v823, %v822
          %v827 = vpack.c.b16 %v825, %v824
          %vm830 = vcmask 261120
          %v832 = vsel %vm830, %v795, 0
          %v835 = vsel %vm830, %v796, 0
          %837 = vmatprep.subr.bf16.mxu0 0
          %838 = vmatpush1.bf16.msra.mxu0 0
          %839 = vmatprep.subr.bf16.mxu0 0
          %840 = vmatpush1.bf16.msra.mxu0 0
          %841 = vmatprep.subr.bf16.mxu0 0
          %842 = vmatpush1.bf16.msra.mxu0 0
          %843 = vmatprep.subr.bf16.mxu0 0
          %844 = vmatpush1.bf16.msra.mxu0 0
          %845 = vmatprep.subr.bf16.mxu0 0
          %846 = vmatpush1.bf16.msra.mxu0 0
          %847 = vmatprep.subr.bf16.mxu0 0
          %848 = vmatpush1.bf16.msra.mxu0 0
          %849 = vmatprep.subr.bf16.mxu0 0
          %850 = vmatpush1.bf16.msra.mxu0 %v827
          %851 = vmatprep.subr.bf16.mxu0 0
          %852 = vmatpush1.bf16.msra.mxu0 %v826
          %853 = vmatprep.subr.bf16.mxu0 0
          %854 = vmatpush2.bf16.msra.mxu0 0
          %855 = vmatprep.subr.bf16.mxu0 0
          %856 = vmatpush2.bf16.msra.mxu0 0
          %857 = vmatprep.subr.bf16.mxu0 0
          %858 = vmatpush2.bf16.msra.mxu0 0
          %859 = vmatprep.subr.bf16.mxu0 0
          %860 = vmatpush2.bf16.msra.mxu0 0
          %861 = vmatprep.subr.bf16.mxu0 0
          %862 = vmatpush2.bf16.msra.mxu0 0
          %863 = vmatprep.subr.bf16.mxu0 0
          %864 = vmatpush2.bf16.msra.mxu0 0
          %865 = vmatprep.subr.bf16.mxu0 0
          %866 = vmatpush2.bf16.msra.mxu0 0
          %867 = vmatprep.subr.bf16.mxu0 0
          %868 = vmatpush2.bf16.msra.mxu0 0
          %869 = vmatprep.mubr.bf16.mxu0 0
          %870 = vmatmul.mubr.bf16.gmra.mxu0 %v832
          %v871 = vpop.f32.mrf.mxu0
          %v872 = vadd.f32 %v809, %v871
          %v873 = vpop.f32.mrf.mxu0
          %v874 = vpop.f32.mrf.mxu0
          %v875 = vadd.f32 %v810, %v874
          %v876 = vpop.f32.mrf.mxu0
          %877 = vmatprep.mubr.bf16.mxu0 0
          %878 = vmatmul.mubr.bf16.gmra.mxu0 %v835
          %v879 = vpop.f32.mrf.mxu0
          %v880 = vadd.f32 %v811, %v879
          %v881 = vpop.f32.mrf.mxu0
          %v882 = vpop.f32.mrf.mxu0
          %v883 = vadd.f32 %v812, %v882
          %v884 = vpop.f32.mrf.mxu0
          %885 = vdwg.mxu0
          %887 = vset.pattern.permute.xlu0 0
          %888 = vperm.xlu0 %887, %v814
          %v889 = vpop.permute.xlu0 %888
          %892 = vset.pattern.permute.xlu0 0
          %893 = vperm.xlu0 %892, %v815
          %v894 = vpop.permute.xlu0 %893
          %897 = vset.pattern.permute.xlu0 0
          %898 = vperm.xlu0 %897, %v816
          %v899 = vpop.permute.xlu0 %898
          %902 = vset.pattern.permute.xlu0 0
          %903 = vperm.xlu0 %902, %v817
          %v904 = vpop.permute.xlu0 %903
          %v906 = vmul.f32 %v889, %v872
          %v907 = vmul.f32 %v894, %v875
          %v908 = vmul.f32 %v899, %v880
          %v909 = vmul.f32 %v904, %v883
          %v910 = vld [vmem:[%s7] sm:$0x1]
          %v912 = vlaneseq
          %v913 = vshrl.u32 %v912, 7
          %v914 = vsub.s32 0, %v913
          %v915 = vrot.slane %v910, %v914
          %v917 = vadd.f32 %v906, %v915
          %v918 = vadd.f32 %v907, %v915
          %v919 = vadd.f32 %v908, %v915
          %v920 = vadd.f32 %v909, %v915
          %v921 = vmax.f32 %v917, 0.0
          %v922 = vmax.f32 %v918, 0.0
          %v923 = vmax.f32 %v919, 0.0
          %v924 = vmax.f32 %v920, 0.0
          %v925 = vmul.f32 %v921, %v574
          %v926 = vmul.f32 %v922, %v575
          %v927 = vmul.f32 %v923, %v576
          %v928 = vmul.f32 %v924, %v577
          %v929 = vpack.c.bf16 %v926, %v925
          %v930 = vpack.c.bf16 %v928, %v927
          %v933 = vunpack.c.l.b16 %v929
          %v934 = vunpack.c.h.b16 %v929
          %v935 = vunpack.c.l.b16 %v930
          %v936 = vunpack.c.h.b16 %v930
          %v937 = vpack.c.b16 %v933, %v933
          %v938 = vpack.c.b16 %v934, %v934
          %v939 = vpack.c.b16 %v935, %v935
          %v940 = vpack.c.b16 %v936, %v936
          %s945 = smul.addr %s801, 4
          %s946 = scalar_lea.vmem [#allocation3], %s945
          %947 = vst [vmem:[%s946] sm:$0xf] %v937
          %948 = vst [vmem:[%s946 + $0x4] sm:$0xf] %v938
          %949 = vst [vmem:[%s946 + $0x8] sm:$0xf] %v939
          %950 = vst [vmem:[%s946 + $0xc] sm:$0xf] %v940
          %v951 = vld [vmem:[#allocation5] sm:$0x1]
          %v952 = vadd.f32 %v925, %v926
          %v953 = vadd.f32 %v952, %v927
          %v954 = vadd.f32 %v953, %v928
          %v955 = vrot.slane %v954, 4
          %v956 = vadd.f32 %v954, %v955
          %v957 = vrot.slane %v956, 2
          %v958 = vadd.f32 %v956, %v957
          %v959 = vrot.slane %v958, 1
          %v960 = vadd.f32 %v958, %v959
          %v961 = vadd.f32 %v951, %v960
          %962 = vst [vmem:[#allocation5] sm:$0x1] %v961
          %v963 = vld [vmem:[#allocation5 + $0x1] sm:$0x1]
          %v964 = vmul.f32 %v925, %v925
          %v965 = vmul.f32 %v926, %v926
          %v966 = vmul.f32 %v927, %v927
          %v967 = vmul.f32 %v928, %v928
          %v968 = vadd.f32 %v964, %v965
          %v969 = vadd.f32 %v968, %v966
          %v970 = vadd.f32 %v969, %v967
          %v971 = vrot.slane %v970, 4
          %v972 = vadd.f32 %v970, %v971
          %v973 = vrot.slane %v972, 2
          %v974 = vadd.f32 %v972, %v973
          %v975 = vrot.slane %v974, 1
          %v976 = vadd.f32 %v974, %v975
          %v977 = vadd.f32 %v963, %v976
          %978 = vst [vmem:[#allocation5 + $0x1] sm:$0x1] %v977
        $region96: #{tpu_custom_call.1} parent=79 // pred_fallthru
          _
        %p979 = scmp.eq.s32.totalorder %s33, 1
        // Predicated region
        $region101: #{tpu_custom_call.1} parent=79 // pred_check
          %p980 = pneg %p979
        $region102: #{tpu_custom_call.1} parent=79 // pred_check_branch
          %982 = sbr.rel (%p980) target = $region104
        $region103: #{tpu_custom_call.1} parent=79 // pred_region
          %p983 = scmp.eq.s32.totalorder %s34, 0
          // Predicated region
          $region105: #{tpu_custom_call.1} parent=103 // pred_check
            %p984 = pneg %p983
          $region106: #{tpu_custom_call.1} parent=103 // pred_check_branch
            %986 = sbr.rel (%p984) target = $region108
          $region107: #{tpu_custom_call.1} parent=103 // pred_region
            %v987 = vld [vmem:[#allocation5] sm:$0x1]
            %v988 = vmul.f32 %v987, 0.03125
            %v989 = vld [vmem:[#allocation5 + $0x1] sm:$0x1]
            %v990 = vmul.f32 %v989, 0.03125
            %v991 = vmul.f32 %v988, %v988
            %v992 = vsub.f32 %v990, %v991
            %v993 = vadd.f32 %v992, 1e-05
            %v994 = vrsqrt.pop %v993
            %v995 = vld [vmem:[%s8] sm:$0x1]
            %v996 = vmul.f32 %v994, %v995
            %997 = vst [vmem:[#allocation7] sm:$0x1] %v996
            %v998 = vld [vmem:[%s9] sm:$0x1]
            %v999 = vmul.f32 %v988, %v996
            %v1000 = vsub.f32 %v998, %v999
            %1001 = vst [vmem:[#allocation7 + $0x1] sm:$0x1] %v1000
          $region108: #{tpu_custom_call.1} parent=103 // pred_fallthru
            _
          %v1002 = vld [vmem:[#allocation7] sm:$0x1]
          %v1003 = vld [vmem:[#allocation7 + $0x1] sm:$0x1]
          %v1004 = vld [vmem:[%s550] sm:$0xff]
          %v1005 = vunpack.c.l.s8.bf16 %v1004
          %v1006 = vunpack.c.h.s8.bf16 %v1004
          %v1007 = vld [vmem:[#allocation3] sm:$0xf]
          %v1008 = vld [vmem:[#allocation3 + $0x4] sm:$0xf]
          %v1009 = vld [vmem:[#allocation3 + $0x8] sm:$0xf]
          %v1010 = vld [vmem:[#allocation3 + $0xc] sm:$0xf]
          %v1015 = vunpack.c.l.b16 %v1007
          %v1016 = vunpack.c.l.b16 %v1008
          %v1017 = vunpack.c.l.b16 %v1009
          %v1018 = vunpack.c.l.b16 %v1010
          %v1019 = vpack.c.b16 %v1016, %v1015
          %v1020 = vpack.c.b16 %v1018, %v1017
          %vm1023 = vcmask 261120
          %v1025 = vsel %vm1023, %v1005, 0
          %v1028 = vsel %vm1023, %v1006, 0
          %1030 = vmatprep.subr.bf16.mxu0 0
          %1031 = vmatpush1.bf16.msra.mxu0 0
          %1032 = vmatprep.subr.bf16.mxu0 0
          %1033 = vmatpush1.bf16.msra.mxu0 0
          %1034 = vmatprep.subr.bf16.mxu0 0
          %1035 = vmatpush1.bf16.msra.mxu0 0
          %1036 = vmatprep.subr.bf16.mxu0 0
          %1037 = vmatpush1.bf16.msra.mxu0 0
          %1038 = vmatprep.subr.bf16.mxu0 0
          %1039 = vmatpush1.bf16.msra.mxu0 0
          %1040 = vmatprep.subr.bf16.mxu0 0
          %1041 = vmatpush1.bf16.msra.mxu0 0
          %1042 = vmatprep.subr.bf16.mxu0 0
          %1043 = vmatpush1.bf16.msra.mxu0 %v1020
          %1044 = vmatprep.subr.bf16.mxu0 0
          %1045 = vmatpush1.bf16.msra.mxu0 %v1019
          %1046 = vmatprep.subr.bf16.mxu0 0
          %1047 = vmatpush2.bf16.msra.mxu0 0
          %1048 = vmatprep.subr.bf16.mxu0 0
          %1049 = vmatpush2.bf16.msra.mxu0 0
          %1050 = vmatprep.subr.bf16.mxu0 0
          %1051 = vmatpush2.bf16.msra.mxu0 0
          %1052 = vmatprep.subr.bf16.mxu0 0
          %1053 = vmatpush2.bf16.msra.mxu0 0
          %1054 = vmatprep.subr.bf16.mxu0 0
          %1055 = vmatpush2.bf16.msra.mxu0 0
          %1056 = vmatprep.subr.bf16.mxu0 0
          %1057 = vmatpush2.bf16.msra.mxu0 0
          %1058 = vmatprep.subr.bf16.mxu0 0
          %1059 = vmatpush2.bf16.msra.mxu0 0
          %1060 = vmatprep.subr.bf16.mxu0 0
          %1061 = vmatpush2.bf16.msra.mxu0 0
          %1062 = vmatprep.mubr.bf16.mxu0 0
          %1063 = vmatmul.mubr.bf16.gmra.mxu0 %v1025
          %v1064 = vpop.f32.mrf.mxu0
          %v1065 = vadd.f32 0.0, %v1064
          %v1066 = vpop.f32.mrf.mxu0
          %v1067 = vpop.f32.mrf.mxu0
          %v1068 = vadd.f32 0.0, %v1067
          %v1069 = vpop.f32.mrf.mxu0
          %1070 = vmatprep.mubr.bf16.mxu0 0
          %1071 = vmatmul.mubr.bf16.gmra.mxu0 %v1028
          %v1072 = vpop.f32.mrf.mxu0
          %v1073 = vadd.f32 0.0, %v1072
          %v1074 = vpop.f32.mrf.mxu0
          %v1075 = vpop.f32.mrf.mxu0
          %v1076 = vadd.f32 0.0, %v1075
          %v1077 = vpop.f32.mrf.mxu0
          %1078 = vdwg.mxu0
          %s1079 = scalar_lea.vmem %s3, %s555
          %v1080 = vld [vmem:[%s1079] sm:$0xff]
          %v1081 = vld [vmem:[%s1079 + $0x8] sm:$0xff]
          %v1082 = vld [vmem:[%s1079 + $0x10] sm:$0xff]
          %v1083 = vld [vmem:[%s1079 + $0x18] sm:$0xff]
          %v1084 = vlaneseq
          %v1085 = vshrl.u32 %v1084, 7
          %v1086 = vsub.s32 0, %v1085
          %v1087 = vrot.slane %v1002, %v1086
          %v1088 = vmul.f32 %v1065, %v1087
          %v1089 = vmul.f32 %v1068, %v1087
          %v1090 = vmul.f32 %v1073, %v1087
          %v1091 = vmul.f32 %v1076, %v1087
          %1093 = vset.pattern.permute.xlu0 0
          %1094 = vperm.xlu0 %1093, %v1080
          %v1095 = vpop.permute.xlu0 %1094
          %1098 = vset.pattern.permute.xlu0 0
          %1099 = vperm.xlu0 %1098, %v1081
          %v1100 = vpop.permute.xlu0 %1099
          %1103 = vset.pattern.permute.xlu0 0
          %1104 = vperm.xlu0 %1103, %v1082
          %v1105 = vpop.permute.xlu0 %1104
          %1108 = vset.pattern.permute.xlu0 0
          %1109 = vperm.xlu0 %1108, %v1083
          %v1110 = vpop.permute.xlu0 %1109
          %v1112 = vlaneseq
          %v1113 = vshrl.u32 %v1112, 7
          %v1114 = vsub.s32 0, %v1113
          %v1115 = vrot.slane %v1003, %v1114
          %v1116 = vmul.f32 %v1095, %v1115
          %v1117 = vmul.f32 %v1100, %v1115
          %v1118 = vmul.f32 %v1105, %v1115
          %v1119 = vmul.f32 %v1110, %v1115
          %v1120 = vadd.f32 %v1088, %v1116
          %v1121 = vadd.f32 %v1089, %v1117
          %v1122 = vadd.f32 %v1090, %v1118
          %v1123 = vadd.f32 %v1091, %v1119
          %s1124 = sshra.s32 %s555, 3
          %s1125 = sand.u32 %s555, 7
          %s1126 = smul.addr %s1124, 4
          %s1127 = scalar_lea.vmem [#allocation3], %s1126
          %v1128 = vld [vmem:[%s1127] sm:$0xf]
          %v1129 = vld [vmem:[%s1127 + $0x4] sm:$0xf]
          %v1130 = vld [vmem:[%s1127 + $0x8] sm:$0xf]
          %v1131 = vld [vmem:[%s1127 + $0xc] sm:$0xf]
          %v1132 = vunpack.c.l.bf16 %v1128
          %v1133 = vunpack.c.l.bf16 %v1129
          %v1134 = vunpack.c.l.bf16 %v1130
          %v1135 = vunpack.c.l.bf16 %v1131
          %v1136 = vmul.f32 %v1132, %v1087
          %v1137 = vmul.f32 %v1133, %v1087
          %v1138 = vmul.f32 %v1134, %v1087
          %v1139 = vmul.f32 %v1135, %v1087
          %v1140 = vadd.f32 %v1136, %v1115
          %v1141 = vadd.f32 %v1137, %v1115
          %v1142 = vadd.f32 %v1138, %v1115
          %v1143 = vadd.f32 %v1139, %v1115
          %v1144 = vpack.c.bf16 %v1121, %v1120
          %v1145 = vpack.c.bf16 %v1123, %v1122
          %v1146 = vld [vmem:[%s10] sm:$0xf]
          %v1147 = vld [vmem:[%s10 + $0x4] sm:$0xf]
          %v1148 = vld [vmem:[%s10 + $0x8] sm:$0xf]
          %v1149 = vld [vmem:[%s10 + $0xc] sm:$0xf]
          %v1150 = vld [vmem:[%s10 + $0x10] sm:$0xf]
          %v1151 = vld [vmem:[%s10 + $0x14] sm:$0xf]
          %v1152 = vld [vmem:[%s10 + $0x18] sm:$0xf]
          %v1153 = vld [vmem:[%s10 + $0x1c] sm:$0xf]
          %v1154 = vld [vmem:[%s10 + $0x20] sm:$0xf]
          %v1155 = vld [vmem:[%s10 + $0x24] sm:$0xf]
          %v1156 = vld [vmem:[%s10 + $0x28] sm:$0xf]
          %v1157 = vld [vmem:[%s10 + $0x2c] sm:$0xf]
          %v1158 = vld [vmem:[%s10 + $0x30] sm:$0xf]
          %v1159 = vld [vmem:[%s10 + $0x34] sm:$0xf]
          %v1160 = vld [vmem:[%s10 + $0x38] sm:$0xf]
          %v1161 = vld [vmem:[%s10 + $0x3c] sm:$0xf]
          %v1162 = vpack.c.bf16 %v1141, %v1140
          %v1163 = vpack.c.bf16 %v1143, %v1142
          %v1164 = vld [vmem:[#allocation14] sm:$0xf]
          %v1165 = vld [vmem:[#allocation14 + $0x4] sm:$0xf]
          %v1166 = vld [vmem:[#allocation14 + $0x8] sm:$0xf]
          %v1167 = vld [vmem:[#allocation14 + $0xc] sm:$0xf]
          %v1168 = vld [vmem:[#allocation14 + $0x10] sm:$0xf]
          %v1169 = vld [vmem:[#allocation14 + $0x14] sm:$0xf]
          %v1170 = vld [vmem:[#allocation14 + $0x18] sm:$0xf]
          %v1171 = vld [vmem:[#allocation14 + $0x1c] sm:$0xf]
          %v1172 = vld [vmem:[#allocation14 + $0x20] sm:$0xf]
          %v1173 = vld [vmem:[#allocation14 + $0x24] sm:$0xf]
          %v1174 = vld [vmem:[#allocation14 + $0x28] sm:$0xf]
          %v1175 = vld [vmem:[#allocation14 + $0x2c] sm:$0xf]
          %v1176 = vld [vmem:[#allocation14 + $0x30] sm:$0xf]
          %v1177 = vld [vmem:[#allocation14 + $0x34] sm:$0xf]
          %v1178 = vld [vmem:[#allocation14 + $0x38] sm:$0xf]
          %v1179 = vld [vmem:[#allocation14 + $0x3c] sm:$0xf]
          %v1196 = vunpack.c.l.b16 %v1164
          %v1197 = vunpack.c.l.b16 %v1165
          %v1198 = vunpack.c.l.b16 %v1166
          %v1199 = vunpack.c.l.b16 %v1167
          %v1200 = vunpack.c.l.b16 %v1168
          %v1201 = vunpack.c.l.b16 %v1169
          %v1202 = vunpack.c.l.b16 %v1170
          %v1203 = vunpack.c.l.b16 %v1171
          %v1204 = vunpack.c.l.b16 %v1172
          %v1205 = vunpack.c.l.b16 %v1173
          %v1206 = vunpack.c.l.b16 %v1174
          %v1207 = vunpack.c.l.b16 %v1175
          %v1208 = vunpack.c.l.b16 %v1176
          %v1209 = vunpack.c.l.b16 %v1177
          %v1210 = vunpack.c.l.b16 %v1178
          %v1211 = vunpack.c.l.b16 %v1179
          %v1212 = vpack.c.b16 %v1197, %v1196
          %v1213 = vpack.c.b16 %v1199, %v1198
          %v1214 = vpack.c.b16 %v1201, %v1200
          %v1215 = vpack.c.b16 %v1203, %v1202
          %v1216 = vpack.c.b16 %v1205, %v1204
          %v1217 = vpack.c.b16 %v1207, %v1206
          %v1218 = vpack.c.b16 %v1209, %v1208
          %v1219 = vpack.c.b16 %v1211, %v1210
          %1228 = vmatprep.subr.bf16.mxu0 0
          %1229 = vmatpush1.bf16.msra.mxu0 %v1219
          %1230 = vmatprep.subr.bf16.mxu0 0
          %1231 = vmatpush1.bf16.msra.mxu0 %v1218
          %1232 = vmatprep.subr.bf16.mxu0 0
          %1233 = vmatpush1.bf16.msra.mxu0 %v1217
          %1234 = vmatprep.subr.bf16.mxu0 0
          %1235 = vmatpush1.bf16.msra.mxu0 %v1216
          %1236 = vmatprep.subr.bf16.mxu0 0
          %1237 = vmatpush1.bf16.msra.mxu0 %v1215
          %1238 = vmatprep.subr.bf16.mxu0 0
          %1239 = vmatpush1.bf16.msra.mxu0 %v1214
          %1240 = vmatprep.subr.bf16.mxu0 0
          %1241 = vmatpush1.bf16.msra.mxu0 %v1213
          %1242 = vmatprep.subr.bf16.mxu0 0
          %1243 = vmatpush1.bf16.msra.mxu0 %v1212
          %1244 = vmatprep.subr.bf16.mxu0 0
          %1245 = vmatpush2.bf16.msra.mxu0 0
          %1246 = vmatprep.subr.bf16.mxu0 0
          %1247 = vmatpush2.bf16.msra.mxu0 0
          %1248 = vmatprep.subr.bf16.mxu0 0
          %1249 = vmatpush2.bf16.msra.mxu0 0
          %1250 = vmatprep.subr.bf16.mxu0 0
          %1251 = vmatpush2.bf16.msra.mxu0 0
          %1252 = vmatprep.subr.bf16.mxu0 0
          %1253 = vmatpush2.bf16.msra.mxu0 0
          %1254 = vmatprep.subr.bf16.mxu0 0
          %1255 = vmatpush2.bf16.msra.mxu0 0
          %1256 = vmatprep.subr.bf16.mxu0 0
          %1257 = vmatpush2.bf16.msra.mxu0 0
          %1258 = vmatprep.subr.bf16.mxu0 0
          %1259 = vmatpush2.bf16.msra.mxu0 0
          %1260 = vmatprep.mubr.bf16.mxu0 0
          %1261 = vmatmul.mubr.bf16.gmra.mxu0 %v1162
          %v1262 = vpop.f32.mrf.mxu0
          %v1263 = vadd.f32 0.0, %v1262
          %v1264 = vpop.f32.mrf.mxu0
          %v1265 = vpop.f32.mrf.mxu0
          %v1266 = vadd.f32 0.0, %v1265
          %v1267 = vpop.f32.mrf.mxu0
          %1268 = vmatprep.mubr.bf16.mxu0 0
          %1269 = vmatmul.mubr.bf16.gmra.mxu0 %v1163
          %v1270 = vpop.f32.mrf.mxu0
          %v1271 = vadd.f32 0.0, %v1270
          %v1272 = vpop.f32.mrf.mxu0
          %v1273 = vpop.f32.mrf.mxu0
          %v1274 = vadd.f32 0.0, %v1273
          %v1275 = vpop.f32.mrf.mxu0
          %1276 = vdwg.mxu0
          %v1293 = vunpack.c.l.b16 %v1146
          %v1294 = vunpack.c.l.b16 %v1147
          %v1295 = vunpack.c.l.b16 %v1148
          %v1296 = vunpack.c.l.b16 %v1149
          %v1297 = vunpack.c.l.b16 %v1150
          %v1298 = vunpack.c.l.b16 %v1151
          %v1299 = vunpack.c.l.b16 %v1152
          %v1300 = vunpack.c.l.b16 %v1153
          %v1301 = vunpack.c.l.b16 %v1154
          %v1302 = vunpack.c.l.b16 %v1155
          %v1303 = vunpack.c.l.b16 %v1156
          %v1304 = vunpack.c.l.b16 %v1157
          %v1305 = vunpack.c.l.b16 %v1158
          %v1306 = vunpack.c.l.b16 %v1159
          %v1307 = vunpack.c.l.b16 %v1160
          %v1308 = vunpack.c.l.b16 %v1161
          %v1309 = vpack.c.b16 %v1294, %v1293
          %v1310 = vpack.c.b16 %v1296, %v1295
          %v1311 = vpack.c.b16 %v1298, %v1297
          %v1312 = vpack.c.b16 %v1300, %v1299
          %v1313 = vpack.c.b16 %v1302, %v1301
          %v1314 = vpack.c.b16 %v1304, %v1303
          %v1315 = vpack.c.b16 %v1306, %v1305
          %v1316 = vpack.c.b16 %v1308, %v1307
          %1325 = vmatprep.subr.bf16.mxu0 0
          %1326 = vmatpush1.bf16.msra.mxu0 %v1316
          %1327 = vmatprep.subr.bf16.mxu0 0
          %1328 = vmatpush1.bf16.msra.mxu0 %v1315
          %1329 = vmatprep.subr.bf16.mxu0 0
          %1330 = vmatpush1.bf16.msra.mxu0 %v1314
          %1331 = vmatprep.subr.bf16.mxu0 0
          %1332 = vmatpush1.bf16.msra.mxu0 %v1313
          %1333 = vmatprep.subr.bf16.mxu0 0
          %1334 = vmatpush1.bf16.msra.mxu0 %v1312
          %1335 = vmatprep.subr.bf16.mxu0 0
          %1336 = vmatpush1.bf16.msra.mxu0 %v1311
          %1337 = vmatprep.subr.bf16.mxu0 0
          %1338 = vmatpush1.bf16.msra.mxu0 %v1310
          %1339 = vmatprep.subr.bf16.mxu0 0
          %1340 = vmatpush1.bf16.msra.mxu0 %v1309
          %1341 = vmatprep.subr.bf16.mxu0 0
          %1342 = vmatpush2.bf16.msra.mxu0 0
          %1343 = vmatprep.subr.bf16.mxu0 0
          %1344 = vmatpush2.bf16.msra.mxu0 0
          %1345 = vmatprep.subr.bf16.mxu0 0
          %1346 = vmatpush2.bf16.msra.mxu0 0
          %1347 = vmatprep.subr.bf16.mxu0 0
          %1348 = vmatpush2.bf16.msra.mxu0 0
          %1349 = vmatprep.subr.bf16.mxu0 0
          %1350 = vmatpush2.bf16.msra.mxu0 0
          %1351 = vmatprep.subr.bf16.mxu0 0
          %1352 = vmatpush2.bf16.msra.mxu0 0
          %1353 = vmatprep.subr.bf16.mxu0 0
          %1354 = vmatpush2.bf16.msra.mxu0 0
          %1355 = vmatprep.subr.bf16.mxu0 0
          %1356 = vmatpush2.bf16.msra.mxu0 0
          %1357 = vmatprep.mubr.bf16.mxu0 0
          %1358 = vmatmul.mubr.bf16.gmra.mxu0 %v1144
          %v1359 = vpop.f32.mrf.mxu0
          %v1360 = vadd.f32 %v1263, %v1359
          %v1361 = vpop.f32.mrf.mxu0
          %v1362 = vpop.f32.mrf.mxu0
          %v1363 = vadd.f32 %v1266, %v1362
          %v1364 = vpop.f32.mrf.mxu0
          %1365 = vmatprep.mubr.bf16.mxu0 0
          %1366 = vmatmul.mubr.bf16.gmra.mxu0 %v1145
          %v1367 = vpop.f32.mrf.mxu0
          %v1368 = vadd.f32 %v1271, %v1367
          %v1369 = vpop.f32.mrf.mxu0
          %v1370 = vpop.f32.mrf.mxu0
          %v1371 = vadd.f32 %v1274, %v1370
          %v1372 = vpop.f32.mrf.mxu0
          %1373 = vdwg.mxu0
          %v1374 = vld [vmem:[%s12] sm:$0x1]
          %v1376 = vlaneseq
          %v1377 = vshrl.u32 %v1376, 7
          %v1378 = vsub.s32 0, %v1377
          %v1379 = vrot.slane %v1374, %v1378
          %v1381 = vadd.f32 %v1360, %v1379
          %v1382 = vadd.f32 %v1363, %v1379
          %v1383 = vadd.f32 %v1368, %v1379
          %v1384 = vadd.f32 %v1371, %v1379
          %v1385 = vmax.f32 %v1381, 0.0
          %v1386 = vmax.f32 %v1382, 0.0
          %v1387 = vmax.f32 %v1383, 0.0
          %v1388 = vmax.f32 %v1384, 0.0
          %v1389 = vmul.f32 %v1385, %v574
          %v1390 = vmul.f32 %v1386, %v575
          %v1391 = vmul.f32 %v1387, %v576
          %v1392 = vmul.f32 %v1388, %v577
          %s1393 = scalar_lea.vmem [#allocation4], %s555
          %1394 = vst [vmem:[%s1393] sm:$0xff] %v1389
          %1395 = vst [vmem:[%s1393 + $0x8] sm:$0xff] %v1390
          %1396 = vst [vmem:[%s1393 + $0x10] sm:$0xff] %v1391
          %1397 = vst [vmem:[%s1393 + $0x18] sm:$0xff] %v1392
          %v1398 = vld [vmem:[#allocation6] sm:$0x1]
          %v1399 = vadd.f32 %v1389, %v1390
          %v1400 = vadd.f32 %v1399, %v1391
          %v1401 = vadd.f32 %v1400, %v1392
          %v1402 = vrot.slane %v1401, 4
          %v1403 = vadd.f32 %v1401, %v1402
          %v1404 = vrot.slane %v1403, 2
          %v1405 = vadd.f32 %v1403, %v1404
          %v1406 = vrot.slane %v1405, 1
          %v1407 = vadd.f32 %v1405, %v1406
          %v1408 = vadd.f32 %v1398, %v1407
          %1409 = vst [vmem:[#allocation6] sm:$0x1] %v1408
          %v1410 = vld [vmem:[#allocation6 + $0x1] sm:$0x1]
          %v1411 = vmul.f32 %v1389, %v1389
          %v1412 = vmul.f32 %v1390, %v1390
          %v1413 = vmul.f32 %v1391, %v1391
          %v1414 = vmul.f32 %v1392, %v1392
          %v1415 = vadd.f32 %v1411, %v1412
          %v1416 = vadd.f32 %v1415, %v1413
          %v1417 = vadd.f32 %v1416, %v1414
          %v1418 = vrot.slane %v1417, 4
          %v1419 = vadd.f32 %v1417, %v1418
          %v1420 = vrot.slane %v1419, 2
          %v1421 = vadd.f32 %v1419, %v1420
          %v1422 = vrot.slane %v1421, 1
          %v1423 = vadd.f32 %v1421, %v1422
          %v1424 = vadd.f32 %v1410, %v1423
          %1425 = vst [vmem:[#allocation6 + $0x1] sm:$0x1] %v1424
        $region104: #{tpu_custom_call.1} parent=79 // pred_fallthru
          _
        %p1426 = scmp.eq.s32.totalorder %s33, 2
        // Predicated region
        $region109: #{tpu_custom_call.1} parent=79 // pred_check
          %p1427 = pneg %p1426
        $region110: #{tpu_custom_call.1} parent=79 // pred_check_branch
          %1429 = sbr.rel (%p1427) target = $region112
        $region111: #{tpu_custom_call.1} parent=79 // pred_region
          %p1430 = scmp.eq.s32.totalorder %s34, 0
          // Predicated region
          $region113: #{tpu_custom_call.1} parent=111 // pred_check
            %p1431 = pneg %p1430
          $region114: #{tpu_custom_call.1} parent=111 // pred_check_branch
            %1433 = sbr.rel (%p1431) target = $region116
          $region115: #{tpu_custom_call.1} parent=111 // pred_region
            %v1434 = vld [vmem:[#allocation6] sm:$0x1]
            %v1435 = vmul.f32 %v1434, 0.03125
            %v1436 = vld [vmem:[#allocation6 + $0x1] sm:$0x1]
            %v1437 = vmul.f32 %v1436, 0.03125
            %v1438 = vmul.f32 %v1435, %v1435
            %v1439 = vsub.f32 %v1437, %v1438
            %v1440 = vadd.f32 %v1439, 1e-05
            %v1441 = vrsqrt.pop %v1440
            %v1442 = vld [vmem:[%s13] sm:$0x1]
            %v1443 = vmul.f32 %v1441, %v1442
            %1444 = vst [vmem:[#allocation8] sm:$0x1] %v1443
            %v1445 = vld [vmem:[%s14] sm:$0x1]
            %v1446 = vmul.f32 %v1435, %v1443
            %v1447 = vsub.f32 %v1445, %v1446
            %1448 = vst [vmem:[#allocation8 + $0x1] sm:$0x1] %v1447
          $region116: #{tpu_custom_call.1} parent=111 // pred_fallthru
            _
          %s1449 = scalar_lea.vmem [#allocation4], %s555
          %v1450 = vld [vmem:[%s1449] sm:$0xff]
          %v1451 = vld [vmem:[%s1449 + $0x8] sm:$0xff]
          %v1452 = vld [vmem:[%s1449 + $0x10] sm:$0xff]
          %v1453 = vld [vmem:[%s1449 + $0x18] sm:$0xff]
          %v1454 = vld [vmem:[#allocation8] sm:$0x1]
          %v1455 = vlaneseq
          %v1456 = vshrl.u32 %v1455, 7
          %v1457 = vsub.s32 0, %v1456
          %v1458 = vrot.slane %v1454, %v1457
          %v1459 = vmul.f32 %v1450, %v1458
          %v1460 = vmul.f32 %v1451, %v1458
          %v1461 = vmul.f32 %v1452, %v1458
          %v1462 = vmul.f32 %v1453, %v1458
          %v1463 = vld [vmem:[#allocation8 + $0x1] sm:$0x1]
          %v1464 = vlaneseq
          %v1465 = vshrl.u32 %v1464, 7
          %v1466 = vsub.s32 0, %v1465
          %v1467 = vrot.slane %v1463, %v1466
          %v1468 = vadd.f32 %v1459, %v1467
          %v1469 = vadd.f32 %v1460, %v1467
          %v1470 = vadd.f32 %v1461, %v1467
          %v1471 = vadd.f32 %v1462, %v1467
          %1472 = vst [vmem:[#allocation15] sm:$0xff] %v1468
          %1473 = vst [vmem:[#allocation15 + $0x8] sm:$0xff] %v1469
          %1474 = vst [vmem:[#allocation15 + $0x10] sm:$0xff] %v1470
          %1475 = vst [vmem:[#allocation15 + $0x18] sm:$0xff] %v1471
        $region112: #{tpu_custom_call.1} parent=79 // pred_fallthru
          _
        // Predicated region
        $region117: #{tpu_custom_call.1} parent=79 // pred_check
          %p1476 = pneg %p383
        $region118: #{tpu_custom_call.1} parent=79 // pred_check_branch
          %1478 = sbr.rel (%p1476) target = $region120
        $region119: #{tpu_custom_call.1} parent=79 // pred_region
          %s1479 = smul.u32 4, %s34
          %s1481 = ssub.s32 512, 512
          %1482 = vsyncadd [#allocation11], %s1481
          %s1483 = smul.addr %s1479, 128
          %s1484 = scalar_lea.hbm %s15, %s1483
          %s1485 = sshll.u32 [#allocation15], 4
          %s1486 = int_to_ptr.vmem [resolvable:$true] %s1485
          %1491 = dma.vmem_to_hbm [thread:$0]  %s1486, 512, %s1484, [#allocation11], 128, 128, 8
        $region120: #{tpu_custom_call.1} parent=79 // pred_fallthru
          _
        // Predicated region
        $region121: #{tpu_custom_call.1} parent=79 // pred_check
          %p1492 = pneg %p383
        $region122: #{tpu_custom_call.1} parent=79 // pred_check_branch
          %1494 = sbr.rel (%p1492) target = $region124
        $region123: #{tpu_custom_call.1} parent=79 // pred_region
          %1495 = dma.done [#allocation11], 512
        $region124: #{tpu_custom_call.1} parent=79 // pred_fallthru
          _
      $region80: #{tpu_custom_call.1} parent=5 // pred_fallthru
        _
      %p1496 = scmp.le.s32.totalorder 2, %s24
      // Predicated region
      $region125: #{tpu_custom_call.1} parent=5 // pred_check
        %p1497 = pneg %p1496
      $region126: #{tpu_custom_call.1} parent=5 // pred_check_branch
        %1499 = sbr.rel (%p1497) target = $region128
      $region127: #{tpu_custom_call.1} parent=5 // pred_region
        %s1500 = ssub.s32 %s24, 2
      $region128: #{tpu_custom_call.1} parent=5 // pred_fallthru
        _
    $region6: #{tpu_custom_call.1} parent=1 // loop_footer
      %s28 = sadd.s32 1, %s24
    $region7: #{tpu_custom_call.1} parent=1 // loop_footer_branch
      %23 = sbr.rel target = $region3
    $region8: #{tpu_custom_call.1} parent=1 // loop_exit
      _
    %1501 = vsyncpa [#allocation10], 1
    %s1502 = scalar_lea.sflag [#allocation10], 1
    %1503 = vsyncpa %s1502, 1
    %1504 = vsyncpa [#allocation13], 1
    %1505 = vsyncpa [#allocation11], 1
    %s1506 = scalar_lea.sflag [#allocation11], 1
    %1507 = vsyncpa %s1506, 1

</llo_original>
